<compile_context>
chip_gen: v7x
topology: tpu7x:2x2x1
jax: 0.10.0
libtpu: 0.0.40
codegen_flags: <defaults>
</compile_context>

<pallas_src>
import jax
import jax.numpy as jnp
from jax.experimental import pallas as pl
from jax.experimental.pallas import tpu as pltpu  # noqa: F401  (kept for easy extension)

D_IN, H1, H2, H3, D_OUT = 3 * 32 * 32, 200, 128, 200, 10


def _dnn3_kernel(x_ref, w1_ref, w2_ref, w3_ref, w4_ref, b_ref, o_ref):
    # Single-step fused MLP: every operand is VMEM-resident.
    x = x_ref[...]                                                     # (B, 3072) bf16
    # Layer 1: Linear(3072 -> 200) + ReLU (bf16 MXU operands, f32 accumulation)
    h1 = jnp.dot(x, w1_ref[...], preferred_element_type=jnp.float32)
    h1 = jnp.maximum(h1 + b_ref[0:1, :H1], 0.0)
    # Layer 2: Linear(200 -> 128) + ReLU
    h2 = jnp.dot(h1.astype(w2_ref.dtype), w2_ref[...],
                 preferred_element_type=jnp.float32)
    h2 = jnp.maximum(h2 + b_ref[1:2, :H2], 0.0)
    # Layer 3: Linear(128 -> 200) + ReLU
    h3 = jnp.dot(h2.astype(w3_ref.dtype), w3_ref[...],
                 preferred_element_type=jnp.float32)
    h3 = jnp.maximum(h3 + b_ref[2:3, :H3], 0.0)
    # Layer 4: Linear(200 -> 10), no activation
    out = jnp.dot(h3.astype(w4_ref.dtype), w4_ref[...],
                  preferred_element_type=jnp.float32) + b_ref[3:4, :D_OUT]
    o_ref[...] = out.astype(o_ref.dtype)


def prepare_params(w1, b1, w2, b2, w3, b3, w4, b4):
    """One-time conversion (call OUTSIDE the per-step forward):
    bf16 weights for the MXU + all four biases packed into one f32 (4, 200) array."""
    w1b, w2b, w3b, w4b = (w.astype(jnp.bfloat16) for w in (w1, w2, w3, w4))
    bias_packed = jnp.zeros((4, H1), jnp.float32)
    bias_packed = bias_packed.at[0, :H1].set(b1.astype(jnp.float32))
    bias_packed = bias_packed.at[1, :H2].set(b2.astype(jnp.float32))
    bias_packed = bias_packed.at[2, :H3].set(b3.astype(jnp.float32))
    bias_packed = bias_packed.at[3, :D_OUT].set(b4.astype(jnp.float32))
    return w1b, w2b, w3b, w4b, bias_packed


@jax.jit
def dnn3_forward(x, w1b, w2b, w3b, w4b, bias_packed):
    B = x.shape[0]
    # torch.flatten(x, 1); the x cast is ~12 KB -> 6 KB (negligible).
    xb = x.reshape(B, -1).astype(jnp.bfloat16)

    return pl.pallas_call(
        _dnn3_kernel,
        out_shape=jax.ShapeDtypeStruct((B, D_OUT), jnp.float32),
        grid=(1,),
        in_specs=[
            pl.BlockSpec((B, D_IN),    lambda i: (0, 0)),   # x  (resident)
            pl.BlockSpec((D_IN, H1),   lambda i: (0, 0)),   # w1 (resident, ~1.2 MB bf16)
            pl.BlockSpec((H1, H2),     lambda i: (0, 0)),   # w2
            pl.BlockSpec((H2, H3),     lambda i: (0, 0)),   # w3
            pl.BlockSpec((H3, D_OUT),  lambda i: (0, 0)),   # w4
            pl.BlockSpec((4, H1),      lambda i: (0, 0)),   # packed biases (1 DMA)
        ],
        out_specs=pl.BlockSpec((B, D_OUT), lambda i: (0, 0)),
    )(xb, w1b, w2b, w3b, w4b, bias_packed)


def init_params(key):
    """Deterministic init matching DNN_3's layer shapes (3072->200->128->200->10)."""
    ks = jax.random.split(key, 8)

    def uniform_like_torch(k, fan_in, shape):
        bound = 1.0 / jnp.sqrt(fan_in)
        return jax.random.uniform(k, shape, jnp.float32, -bound, bound)

    # Stored as (in, out); equivalent to PyTorch's (out, in) weight transposed.
    w1 = uniform_like_torch(ks[0], D_IN, (D_IN, H1))
    b1 = uniform_like_torch(ks[1], D_IN, (H1,))
    w2 = uniform_like_torch(ks[2], H1, (H1, H2))
    b2 = uniform_like_torch(ks[3], H1, (H2,))
    w3 = uniform_like_torch(ks[4], H2, (H2, H3))
    b3 = uniform_like_torch(ks[5], H2, (H3,))
    w4 = uniform_like_torch(ks[6], H3, (H3, D_OUT))
    b4 = uniform_like_torch(ks[7], H3, (D_OUT,))
    return w1, b1, w2, b2, w3, b3, w4, b4


def reference_forward(x, w1, b1, w2, b2, w3, b3, w4, b4):
    x = x.reshape(x.shape[0], -1)
    h1 = jnp.maximum(x @ w1 + b1, 0.0)
    h2 = jnp.maximum(h1 @ w2 + b2, 0.0)
    h3 = jnp.maximum(h2 @ w3 + b3, 0.0)
    return h3 @ w4 + b4


if __name__ == "__main__":
    key = jax.random.PRNGKey(0)
    k_x, k_p = jax.random.split(key)

    # Input consistent with the module: CIFAR-like NCHW, small batch.
    x = jax.random.normal(k_x, (2, 3, 32, 32), dtype=jnp.float32)
    params = init_params(k_p)

    # One-time prep (bf16 weights + packed biases), outside the per-call forward.
    prepped = prepare_params(*params)
    prepped = jax.block_until_ready(prepped)

    out = dnn3_forward(x, *prepped)
    out = jax.block_until_ready(out)

    ref = reference_forward(x, *params)
    assert out.shape == (2, 10), out.shape
    # bf16 MXU inputs (f32 accumulation) -> relaxed tolerance vs the pure-f32 reference.
    max_err = float(jnp.max(jnp.abs(out - ref)))
    assert jnp.allclose(out, ref, atol=2e-2, rtol=2e-2), (
        f"mismatch vs JAX reference (max abs err {max_err})")

    print("KERNEL_OK")
</pallas_src>

<mosaic_0001>
module attributes {stable_mosaic.version = 11 : i64} {
  func.func @_dnn3_kernel(%arg0: i32, %arg1: memref<2x3072xbf16, #tpu.memory_space<vmem>>, %arg2: memref<3072x200xbf16, #tpu.memory_space<vmem>>, %arg3: memref<200x128xbf16, #tpu.memory_space<vmem>>, %arg4: memref<128x200xbf16, #tpu.memory_space<vmem>>, %arg5: memref<200x10xbf16, #tpu.memory_space<vmem>>, %arg6: memref<4x200xf32, #tpu.memory_space<vmem>>, %arg7: memref<2x10xf32, #tpu.memory_space<vmem>>) attributes {dimension_semantics = [#tpu.dimension_semantics<arbitrary>], iteration_bounds = array<i64: 1>, scalar_prefetch = 0 : i64, scratch_operands = 0 : i64, tpu.core_type = #tpu.core_type<tc>, window_params = [{pipeline_mode = #tpu.pipeline_mode<synchronous>, transform_indices = @transform_0, window_bounds = array<i64: 2, 3072>}, {pipeline_mode = #tpu.pipeline_mode<synchronous>, transform_indices = @transform_1, window_bounds = array<i64: 3072, 200>}, {pipeline_mode = #tpu.pipeline_mode<synchronous>, transform_indices = @transform_2, window_bounds = array<i64: 200, 128>}, {pipeline_mode = #tpu.pipeline_mode<synchronous>, transform_indices = @transform_3, window_bounds = array<i64: 128, 200>}, {pipeline_mode = #tpu.pipeline_mode<synchronous>, transform_indices = @transform_4, window_bounds = array<i64: 200, 10>}, {pipeline_mode = #tpu.pipeline_mode<synchronous>, transform_indices = @transform_5, window_bounds = array<i64: 4, 200>}, {pipeline_mode = #tpu.pipeline_mode<synchronous>, transform_indices = @transform_6, window_bounds = array<i64: 2, 10>}]} {
    %c0 = arith.constant 0 : index
    %c0_0 = arith.constant 0 : index
    %0 = vector.load %arg1[%c0, %c0_0] : memref<2x3072xbf16, #tpu.memory_space<vmem>>, vector<2x3072xbf16>
    %c0_1 = arith.constant 0 : index
    %c0_2 = arith.constant 0 : index
    %1 = vector.load %arg2[%c0_1, %c0_2] : memref<3072x200xbf16, #tpu.memory_space<vmem>>, vector<3072x200xbf16>
    %cst = arith.constant dense<0.000000e+00> : vector<2x200xf32>
    %2 = tpu.matmul %0, %1, %cst {dimension_numbers = #tpu.dot_dimension_numbers<[1], [0], [0], [1], [0, 0, 1, 1], [], []>} : vector<2x3072xbf16>, vector<3072x200xbf16>, vector<2x200xf32> -> vector<2x200xf32>
    %c0_3 = arith.constant 0 : index
    %c0_4 = arith.constant 0 : index
    %3 = vector.load %arg6[%c0_3, %c0_4] : memref<4x200xf32, #tpu.memory_space<vmem>>, vector<1x200xf32>
    %4 = vector.broadcast %3 : vector<1x200xf32> to vector<2x200xf32>
    %5 = arith.addf %2, %4 : vector<2x200xf32>
    %cst_5 = arith.constant 0.000000e+00 : f32
    %6 = vector.broadcast %cst_5 : f32 to vector<2x200xf32>
    %7 = arith.maximumf %5, %6 : vector<2x200xf32>
    %8 = arith.truncf %7 : vector<2x200xf32> to vector<2x200xbf16>
    %c0_6 = arith.constant 0 : index
    %c0_7 = arith.constant 0 : index
    %9 = vector.load %arg3[%c0_6, %c0_7] : memref<200x128xbf16, #tpu.memory_space<vmem>>, vector<200x128xbf16>
    %cst_8 = arith.constant dense<0.000000e+00> : vector<2x128xf32>
    %10 = tpu.matmul %8, %9, %cst_8 {dimension_numbers = #tpu.dot_dimension_numbers<[1], [0], [0], [1], [0, 0, 1, 1], [], []>} : vector<2x200xbf16>, vector<200x128xbf16>, vector<2x128xf32> -> vector<2x128xf32>
    %c1 = arith.constant 1 : index
    %c0_9 = arith.constant 0 : index
    %11 = vector.load %arg6[%c1, %c0_9] : memref<4x200xf32, #tpu.memory_space<vmem>>, vector<1x128xf32>
    %12 = vector.broadcast %11 : vector<1x128xf32> to vector<2x128xf32>
    %13 = arith.addf %10, %12 : vector<2x128xf32>
    %cst_10 = arith.constant 0.000000e+00 : f32
    %14 = vector.broadcast %cst_10 : f32 to vector<2x128xf32>
    %15 = arith.maximumf %13, %14 : vector<2x128xf32>
    %16 = arith.truncf %15 : vector<2x128xf32> to vector<2x128xbf16>
    %c0_11 = arith.constant 0 : index
    %c0_12 = arith.constant 0 : index
    %17 = vector.load %arg4[%c0_11, %c0_12] : memref<128x200xbf16, #tpu.memory_space<vmem>>, vector<128x200xbf16>
    %cst_13 = arith.constant dense<0.000000e+00> : vector<2x200xf32>
    %18 = tpu.matmul %16, %17, %cst_13 {dimension_numbers = #tpu.dot_dimension_numbers<[1], [0], [0], [1], [0, 0, 1, 1], [], []>} : vector<2x128xbf16>, vector<128x200xbf16>, vector<2x200xf32> -> vector<2x200xf32>
    %c2 = arith.constant 2 : index
    %c0_14 = arith.constant 0 : index
    %19 = vector.load %arg6[%c2, %c0_14] : memref<4x200xf32, #tpu.memory_space<vmem>>, vector<1x200xf32>
    %20 = vector.broadcast %19 : vector<1x200xf32> to vector<2x200xf32>
    %21 = arith.addf %18, %20 : vector<2x200xf32>
    %cst_15 = arith.constant 0.000000e+00 : f32
    %22 = vector.broadcast %cst_15 : f32 to vector<2x200xf32>
    %23 = arith.maximumf %21, %22 : vector<2x200xf32>
    %24 = arith.truncf %23 : vector<2x200xf32> to vector<2x200xbf16>
    %c0_16 = arith.constant 0 : index
    %c0_17 = arith.constant 0 : index
    %25 = vector.load %arg5[%c0_16, %c0_17] : memref<200x10xbf16, #tpu.memory_space<vmem>>, vector<200x10xbf16>
    %cst_18 = arith.constant dense<0.000000e+00> : vector<2x10xf32>
    %26 = tpu.matmul %24, %25, %cst_18 {dimension_numbers = #tpu.dot_dimension_numbers<[1], [0], [0], [1], [0, 0, 1, 1], [], []>} : vector<2x200xbf16>, vector<200x10xbf16>, vector<2x10xf32> -> vector<2x10xf32>
    %c3 = arith.constant 3 : index
    %c0_19 = arith.constant 0 : index
    %27 = vector.load %arg6[%c3, %c0_19] : memref<4x200xf32, #tpu.memory_space<vmem>>, vector<1x10xf32>
    %28 = vector.broadcast %27 : vector<1x10xf32> to vector<2x10xf32>
    %29 = arith.addf %26, %28 : vector<2x10xf32>
    %c0_20 = arith.constant 0 : index
    %c0_21 = arith.constant 0 : index
    %30 = vector.load %arg7[%c0_20, %c0_21] : memref<2x10xf32, #tpu.memory_space<vmem>>, vector<2x10xf32>
    tpu.vector_store %arg7[%c0_20, %c0_21], %29 {strides = array<i32>} : memref<2x10xf32, #tpu.memory_space<vmem>>, vector<2x10xf32>,
    return
  }
  func.func @transform_0(%arg0: i32) -> (i32, i32) {
    %c0_i32 = arith.constant 0 : i32
    %c0_i32_0 = arith.constant 0 : i32
    %c0_i32_1 = arith.constant 0 : i32
    return %c0_i32, %c0_i32_0 : i32, i32
  }
  func.func @transform_1(%arg0: i32) -> (i32, i32) {
    %c0_i32 = arith.constant 0 : i32
    %c0_i32_0 = arith.constant 0 : i32
    %c0_i32_1 = arith.constant 0 : i32
    return %c0_i32, %c0_i32_0 : i32, i32
  }
  func.func @transform_2(%arg0: i32) -> (i32, i32) {
    %c0_i32 = arith.constant 0 : i32
    %c0_i32_0 = arith.constant 0 : i32
    %c0_i32_1 = arith.constant 0 : i32
    return %c0_i32, %c0_i32_0 : i32, i32
  }
  func.func @transform_3(%arg0: i32) -> (i32, i32) {
    %c0_i32 = arith.constant 0 : i32
    %c0_i32_0 = arith.constant 0 : i32
    %c0_i32_1 = arith.constant 0 : i32
    return %c0_i32, %c0_i32_0 : i32, i32
  }
  func.func @transform_4(%arg0: i32) -> (i32, i32) {
    %c0_i32 = arith.constant 0 : i32
    %c0_i32_0 = arith.constant 0 : i32
    %c0_i32_1 = arith.constant 0 : i32
    return %c0_i32, %c0_i32_0 : i32, i32
  }
  func.func @transform_5(%arg0: i32) -> (i32, i32) {
    %c0_i32 = arith.constant 0 : i32
    %c0_i32_0 = arith.constant 0 : i32
    %c0_i32_1 = arith.constant 0 : i32
    return %c0_i32, %c0_i32_0 : i32, i32
  }
  func.func @transform_6(%arg0: i32) -> (i32, i32) {
    %c0_i32 = arith.constant 0 : i32
    %c0_i32_0 = arith.constant 0 : i32
    %c0_i32_1 = arith.constant 0 : i32
    return %c0_i32, %c0_i32_0 : i32, i32
  }
}

</mosaic_0001>

<llo_original>
// kernel: dnn3_forward.1
$region0: #{dnn3_forward.1}
  #allocation0 [shape = 'u32[]', space=smem, size = 0x4, offset = 0x4, fixed_abs, tag = 'smem constant byte address 0x4 - core index']
  #allocation1 [shape = 'u32[144,128]{1,0:T(1,128)}', space=vmem, size = 0x12000, scoped, tag = 'internal scratch']
  %s0 = inlined_call_operand.vmem [shape: bf16[2,3072], index: 0, kind: input, shape index: {}]
  %s1 = inlined_call_operand.vmem [shape: bf16[3072,200], index: 1, kind: input, shape index: {}]
  %s2 = inlined_call_operand.vmem [shape: bf16[200,128], index: 2, kind: input, shape index: {}]
  %s3 = inlined_call_operand.vmem [shape: bf16[128,200], index: 3, kind: input, shape index: {}]
  %s4 = inlined_call_operand.vmem [shape: bf16[200,10], index: 4, kind: input, shape index: {}]
  %s5 = inlined_call_operand.vmem [shape: f32[4,200], index: 5, kind: input, shape index: {}]
  %s6 = inlined_call_operand.hbm [shape: f32[2,10], index: 6, kind: output, shape index: {}]
  %s7 = sld [smem:[#allocation0]]
  $region34: #{dnn3_forward.1} parent=0
    _
  %s9 = ssub.s32 1, %s7
  %s10 = scalar_select 0, %s9, %s7
  $region1: #{dnn3_forward.1} parent=0
    #allocation2 [shape = 'u8[1024]{0}', space=vmem, size = 0x400, scoped, tag = 'output window, operand 0, single buffered']
    #allocation3 [shape = 's32[1]{0}', space=sflag, size = 0x4, scoped, tag = 'scoped memory for dnn3_forward.1']
    %11 = vsyncpa [#allocation3], 0
    // Predicated region
    $region2: #{dnn3_forward.1} parent=1 // pred_check
      _
    $region3: #{dnn3_forward.1} parent=1 // pred_check_branch
      %13 = sbr.rel (0) target = $region5
    $region4: #{dnn3_forward.1} parent=1 // pred_region
      _
    $region5: #{dnn3_forward.1} parent=1 // pred_fallthru
      _
    // Predicated region
    $region6: #{dnn3_forward.1} parent=1 // pred_check
      _
    $region7: #{dnn3_forward.1} parent=1 // pred_check_branch
      %15 = sbr.rel (0) target = $region9
    $region8: #{dnn3_forward.1} parent=1 // pred_region
      _
    $region9: #{dnn3_forward.1} parent=1 // pred_fallthru
      _
    // Predicated region
    $region10: #{dnn3_forward.1} parent=1 // pred_check
      _
    $region11: #{dnn3_forward.1} parent=1 // pred_check_branch
      %17 = sbr.rel (0) target = $region13
    $region12: #{dnn3_forward.1} parent=1 // pred_region
      _
    $region13: #{dnn3_forward.1} parent=1 // pred_fallthru
      _
    // Predicated region
    $region14: #{dnn3_forward.1} parent=1 // pred_check
      _
    $region15: #{dnn3_forward.1} parent=1 // pred_check_branch
      %19 = sbr.rel (0) target = $region17
    $region16: #{dnn3_forward.1} parent=1 // pred_region
      _
    $region17: #{dnn3_forward.1} parent=1 // pred_fallthru
      _
    // Predicated region
    $region18: #{dnn3_forward.1} parent=1 // pred_check
      _
    $region19: #{dnn3_forward.1} parent=1 // pred_check_branch
      %21 = sbr.rel (0) target = $region21
    $region20: #{dnn3_forward.1} parent=1 // pred_region
      _
    $region21: #{dnn3_forward.1} parent=1 // pred_fallthru
      _
    // Predicated region
    $region22: #{dnn3_forward.1} parent=1 // pred_check
      _
    $region23: #{dnn3_forward.1} parent=1 // pred_check_branch
      %23 = sbr.rel (0) target = $region25
    $region24: #{dnn3_forward.1} parent=1 // pred_region
      _
    $region25: #{dnn3_forward.1} parent=1 // pred_fallthru
      _
    %v25 = vld [vmem:[%s0] sm:$0xff]
    %v26 = vld [vmem:[%s0 + $0x8] sm:$0xff]
    %v27 = vld [vmem:[%s0 + $0x10] sm:$0xff]
    %v28 = vld [vmem:[%s1] sm:$0xff]
    %v29 = vld [vmem:[%s1 + $0x8] sm:$0xff]
    %v30 = vld [vmem:[%s1 + $0x10] sm:$0xff]
    %v31 = vld [vmem:[%s1 + $0x18] sm:$0xff]
    %v32 = vld [vmem:[%s1 + $0x20] sm:$0xff]
    %v33 = vld [vmem:[%s1 + $0x28] sm:$0xff]
    %v34 = vld [vmem:[%s1 + $0x30] sm:$0xff]
    %v35 = vld [vmem:[%s1 + $0x38] sm:$0xff]
    %v36 = vld [vmem:[%s1 + $0x40] sm:$0xff]
    %v37 = vld [vmem:[%s1 + $0x48] sm:$0xff]
    %v38 = vld [vmem:[%s1 + $0x50] sm:$0xff]
    %v39 = vld [vmem:[%s1 + $0x58] sm:$0xff]
    %v40 = vld [vmem:[%s1 + $0x60] sm:$0xff]
    %v41 = vld [vmem:[%s1 + $0x68] sm:$0xff]
    %v42 = vld [vmem:[%s1 + $0x70] sm:$0xff]
    %v43 = vld [vmem:[%s1 + $0x78] sm:$0xff]
    %v44 = vld [vmem:[%s1 + $0x80] sm:$0xff]
    %v45 = vld [vmem:[%s1 + $0x88] sm:$0xff]
    %v46 = vld [vmem:[%s1 + $0x90] sm:$0xff]
    %v47 = vld [vmem:[%s1 + $0x98] sm:$0xff]
    %v48 = vld [vmem:[%s1 + $0xa0] sm:$0xff]
    %v49 = vld [vmem:[%s1 + $0xa8] sm:$0xff]
    %v50 = vld [vmem:[%s1 + $0xb0] sm:$0xff]
    %v51 = vld [vmem:[%s1 + $0xb8] sm:$0xff]
    %v52 = vld [vmem:[%s1 + $0xc0] sm:$0xff]
    %v53 = vld [vmem:[%s1 + $0xc8] sm:$0xff]
    %v54 = vld [vmem:[%s1 + $0xd0] sm:$0xff]
    %v55 = vld [vmem:[%s1 + $0xd8] sm:$0xff]
    %v56 = vld [vmem:[%s1 + $0xe0] sm:$0xff]
    %v57 = vld [vmem:[%s1 + $0xe8] sm:$0xff]
    %v58 = vld [vmem:[%s1 + $0xf0] sm:$0xff]
    %v59 = vld [vmem:[%s1 + $0xf8] sm:$0xff]
    %v60 = vld [vmem:[%s1 + $0x100] sm:$0xff]
    %v61 = vld [vmem:[%s1 + $0x108] sm:$0xff]
    %v62 = vld [vmem:[%s1 + $0x110] sm:$0xff]
    %v63 = vld [vmem:[%s1 + $0x118] sm:$0xff]
    %v64 = vld [vmem:[%s1 + $0x120] sm:$0xff]
    %v65 = vld [vmem:[%s1 + $0x128] sm:$0xff]
    %v66 = vld [vmem:[%s1 + $0x130] sm:$0xff]
    %v67 = vld [vmem:[%s1 + $0x138] sm:$0xff]
    %v68 = vld [vmem:[%s1 + $0x140] sm:$0xff]
    %v69 = vld [vmem:[%s1 + $0x148] sm:$0xff]
    %v70 = vld [vmem:[%s1 + $0x150] sm:$0xff]
    %v71 = vld [vmem:[%s1 + $0x158] sm:$0xff]
    %v72 = vld [vmem:[%s1 + $0x160] sm:$0xff]
    %v73 = vld [vmem:[%s1 + $0x168] sm:$0xff]
    %v74 = vld [vmem:[%s1 + $0x170] sm:$0xff]
    %v75 = vld [vmem:[%s1 + $0x178] sm:$0xff]
    %v76 = vld [vmem:[%s1 + $0x180] sm:$0xff]
    %v77 = vld [vmem:[%s1 + $0x188] sm:$0xff]
    %v78 = vld [vmem:[%s1 + $0x190] sm:$0xff]
    %v79 = vld [vmem:[%s1 + $0x198] sm:$0xff]
    %v80 = vld [vmem:[%s1 + $0x1a0] sm:$0xff]
    %v81 = vld [vmem:[%s1 + $0x1a8] sm:$0xff]
    %v82 = vld [vmem:[%s1 + $0x1b0] sm:$0xff]
    %v83 = vld [vmem:[%s1 + $0x1b8] sm:$0xff]
    %v84 = vld [vmem:[%s1 + $0x1c0] sm:$0xff]
    %v85 = vld [vmem:[%s1 + $0x1c8] sm:$0xff]
    %v86 = vld [vmem:[%s1 + $0x1d0] sm:$0xff]
    %v87 = vld [vmem:[%s1 + $0x1d8] sm:$0xff]
    %v88 = vld [vmem:[%s1 + $0x1e0] sm:$0xff]
    %v89 = vld [vmem:[%s1 + $0x1e8] sm:$0xff]
    %v90 = vld [vmem:[%s1 + $0x1f0] sm:$0xff]
    %v91 = vld [vmem:[%s1 + $0x1f8] sm:$0xff]
    %v92 = vld [vmem:[%s1 + $0x200] sm:$0xff]
    %v93 = vld [vmem:[%s1 + $0x208] sm:$0xff]
    %v94 = vld [vmem:[%s1 + $0x210] sm:$0xff]
    %v95 = vld [vmem:[%s1 + $0x218] sm:$0xff]
    %v96 = vld [vmem:[%s1 + $0x220] sm:$0xff]
    %v97 = vld [vmem:[%s1 + $0x228] sm:$0xff]
    %v98 = vld [vmem:[%s1 + $0x230] sm:$0xff]
    %v99 = vld [vmem:[%s1 + $0x238] sm:$0xff]
    %v100 = vld [vmem:[%s1 + $0x240] sm:$0xff]
    %v101 = vld [vmem:[%s1 + $0x248] sm:$0xff]
    %v102 = vld [vmem:[%s1 + $0x250] sm:$0xff]
    %v103 = vld [vmem:[%s1 + $0x258] sm:$0xff]
    %v104 = vld [vmem:[%s1 + $0x260] sm:$0xff]
    %v105 = vld [vmem:[%s1 + $0x268] sm:$0xff]
    %v106 = vld [vmem:[%s1 + $0x270] sm:$0xff]
    %v107 = vld [vmem:[%s1 + $0x278] sm:$0xff]
    %v108 = vld [vmem:[%s1 + $0x280] sm:$0xff]
    %v109 = vld [vmem:[%s1 + $0x288] sm:$0xff]
    %v110 = vld [vmem:[%s1 + $0x290] sm:$0xff]
    %v111 = vld [vmem:[%s1 + $0x298] sm:$0xff]
    %v112 = vld [vmem:[%s1 + $0x2a0] sm:$0xff]
    %v113 = vld [vmem:[%s1 + $0x2a8] sm:$0xff]
    %v114 = vld [vmem:[%s1 + $0x2b0] sm:$0xff]
    %v115 = vld [vmem:[%s1 + $0x2b8] sm:$0xff]
    %v116 = vld [vmem:[%s1 + $0x2c0] sm:$0xff]
    %v117 = vld [vmem:[%s1 + $0x2c8] sm:$0xff]
    %v118 = vld [vmem:[%s1 + $0x2d0] sm:$0xff]
    %v119 = vld [vmem:[%s1 + $0x2d8] sm:$0xff]
    %v120 = vld [vmem:[%s1 + $0x2e0] sm:$0xff]
    %v121 = vld [vmem:[%s1 + $0x2e8] sm:$0xff]
    %v122 = vld [vmem:[%s1 + $0x2f0] sm:$0xff]
    %v123 = vld [vmem:[%s1 + $0x2f8] sm:$0xff]
    %v124 = vld [vmem:[%s1 + $0x300] sm:$0xff]
    %v125 = vld [vmem:[%s1 + $0x308] sm:$0xff]
    %v126 = vld [vmem:[%s1 + $0x310] sm:$0xff]
    %v127 = vld [vmem:[%s1 + $0x318] sm:$0xff]
    %v128 = vld [vmem:[%s1 + $0x320] sm:$0xff]
    %v129 = vld [vmem:[%s1 + $0x328] sm:$0xff]
    %v130 = vld [vmem:[%s1 + $0x330] sm:$0xff]
    %v131 = vld [vmem:[%s1 + $0x338] sm:$0xff]
    %v132 = vld [vmem:[%s1 + $0x340] sm:$0xff]
    %v133 = vld [vmem:[%s1 + $0x348] sm:$0xff]
    %v134 = vld [vmem:[%s1 + $0x350] sm:$0xff]
    %v135 = vld [vmem:[%s1 + $0x358] sm:$0xff]
    %v136 = vld [vmem:[%s1 + $0x360] sm:$0xff]
    %v137 = vld [vmem:[%s1 + $0x368] sm:$0xff]
    %v138 = vld [vmem:[%s1 + $0x370] sm:$0xff]
    %v139 = vld [vmem:[%s1 + $0x378] sm:$0xff]
    %v140 = vld [vmem:[%s1 + $0x380] sm:$0xff]
    %v141 = vld [vmem:[%s1 + $0x388] sm:$0xff]
    %v142 = vld [vmem:[%s1 + $0x390] sm:$0xff]
    %v143 = vld [vmem:[%s1 + $0x398] sm:$0xff]
    %v144 = vld [vmem:[%s1 + $0x3a0] sm:$0xff]
    %v145 = vld [vmem:[%s1 + $0x3a8] sm:$0xff]
    %v146 = vld [vmem:[%s1 + $0x3b0] sm:$0xff]
    %v147 = vld [vmem:[%s1 + $0x3b8] sm:$0xff]
    %v148 = vld [vmem:[%s1 + $0x3c0] sm:$0xff]
    %v149 = vld [vmem:[%s1 + $0x3c8] sm:$0xff]
    %v150 = vld [vmem:[%s1 + $0x3d0] sm:$0xff]
    %v151 = vld [vmem:[%s1 + $0x3d8] sm:$0xff]
    %v152 = vld [vmem:[%s1 + $0x3e0] sm:$0xff]
    %v153 = vld [vmem:[%s1 + $0x3e8] sm:$0xff]
    %v154 = vld [vmem:[%s1 + $0x3f0] sm:$0xff]
    %v155 = vld [vmem:[%s1 + $0x3f8] sm:$0xff]
    %v156 = vld [vmem:[%s1 + $0x400] sm:$0xff]
    %v157 = vld [vmem:[%s1 + $0x408] sm:$0xff]
    %v158 = vld [vmem:[%s1 + $0x410] sm:$0xff]
    %v159 = vld [vmem:[%s1 + $0x418] sm:$0xff]
    %v160 = vld [vmem:[%s1 + $0x420] sm:$0xff]
    %v161 = vld [vmem:[%s1 + $0x428] sm:$0xff]
    %v162 = vld [vmem:[%s1 + $0x430] sm:$0xff]
    %v163 = vld [vmem:[%s1 + $0x438] sm:$0xff]
    %v164 = vld [vmem:[%s1 + $0x440] sm:$0xff]
    %v165 = vld [vmem:[%s1 + $0x448] sm:$0xff]
    %v166 = vld [vmem:[%s1 + $0x450] sm:$0xff]
    %v167 = vld [vmem:[%s1 + $0x458] sm:$0xff]
    %v168 = vld [vmem:[%s1 + $0x460] sm:$0xff]
    %v169 = vld [vmem:[%s1 + $0x468] sm:$0xff]
    %v170 = vld [vmem:[%s1 + $0x470] sm:$0xff]
    %v171 = vld [vmem:[%s1 + $0x478] sm:$0xff]
    %v172 = vld [vmem:[%s1 + $0x480] sm:$0xff]
    %v173 = vld [vmem:[%s1 + $0x488] sm:$0xff]
    %v174 = vld [vmem:[%s1 + $0x490] sm:$0xff]
    %v175 = vld [vmem:[%s1 + $0x498] sm:$0xff]
    %v176 = vld [vmem:[%s1 + $0x4a0] sm:$0xff]
    %v177 = vld [vmem:[%s1 + $0x4a8] sm:$0xff]
    %v178 = vld [vmem:[%s1 + $0x4b0] sm:$0xff]
    %v179 = vld [vmem:[%s1 + $0x4b8] sm:$0xff]
    %v180 = vld [vmem:[%s1 + $0x4c0] sm:$0xff]
    %v181 = vld [vmem:[%s1 + $0x4c8] sm:$0xff]
    %v182 = vld [vmem:[%s1 + $0x4d0] sm:$0xff]
    %v183 = vld [vmem:[%s1 + $0x4d8] sm:$0xff]
    %v184 = vld [vmem:[%s1 + $0x4e0] sm:$0xff]
    %v185 = vld [vmem:[%s1 + $0x4e8] sm:$0xff]
    %v186 = vld [vmem:[%s1 + $0x4f0] sm:$0xff]
    %v187 = vld [vmem:[%s1 + $0x4f8] sm:$0xff]
    %v188 = vld [vmem:[%s1 + $0x500] sm:$0xff]
    %v189 = vld [vmem:[%s1 + $0x508] sm:$0xff]
    %v190 = vld [vmem:[%s1 + $0x510] sm:$0xff]
    %v191 = vld [vmem:[%s1 + $0x518] sm:$0xff]
    %v192 = vld [vmem:[%s1 + $0x520] sm:$0xff]
    %v193 = vld [vmem:[%s1 + $0x528] sm:$0xff]
    %v194 = vld [vmem:[%s1 + $0x530] sm:$0xff]
    %v195 = vld [vmem:[%s1 + $0x538] sm:$0xff]
    %v196 = vld [vmem:[%s1 + $0x540] sm:$0xff]
    %v197 = vld [vmem:[%s1 + $0x548] sm:$0xff]
    %v198 = vld [vmem:[%s1 + $0x550] sm:$0xff]
    %v199 = vld [vmem:[%s1 + $0x558] sm:$0xff]
    %v200 = vld [vmem:[%s1 + $0x560] sm:$0xff]
    %v201 = vld [vmem:[%s1 + $0x568] sm:$0xff]
    %v202 = vld [vmem:[%s1 + $0x570] sm:$0xff]
    %v203 = vld [vmem:[%s1 + $0x578] sm:$0xff]
    %v204 = vld [vmem:[%s1 + $0x580] sm:$0xff]
    %v205 = vld [vmem:[%s1 + $0x588] sm:$0xff]
    %v206 = vld [vmem:[%s1 + $0x590] sm:$0xff]
    %v207 = vld [vmem:[%s1 + $0x598] sm:$0xff]
    %v208 = vld [vmem:[%s1 + $0x5a0] sm:$0xff]
    %v209 = vld [vmem:[%s1 + $0x5a8] sm:$0xff]
    %v210 = vld [vmem:[%s1 + $0x5b0] sm:$0xff]
    %v211 = vld [vmem:[%s1 + $0x5b8] sm:$0xff]
    %v212 = vld [vmem:[%s1 + $0x5c0] sm:$0xff]
    %v213 = vld [vmem:[%s1 + $0x5c8] sm:$0xff]
    %v214 = vld [vmem:[%s1 + $0x5d0] sm:$0xff]
    %v215 = vld [vmem:[%s1 + $0x5d8] sm:$0xff]
    %v216 = vld [vmem:[%s1 + $0x5e0] sm:$0xff]
    %v217 = vld [vmem:[%s1 + $0x5e8] sm:$0xff]
    %v218 = vld [vmem:[%s1 + $0x5f0] sm:$0xff]
    %v219 = vld [vmem:[%s1 + $0x5f8] sm:$0xff]
    %v220 = vld [vmem:[%s1 + $0x600] sm:$0xff]
    %v221 = vld [vmem:[%s1 + $0x608] sm:$0xff]
    %v222 = vld [vmem:[%s1 + $0x610] sm:$0xff]
    %v223 = vld [vmem:[%s1 + $0x618] sm:$0xff]
    %v224 = vld [vmem:[%s1 + $0x620] sm:$0xff]
    %v225 = vld [vmem:[%s1 + $0x628] sm:$0xff]
    %v226 = vld [vmem:[%s1 + $0x630] sm:$0xff]
    %v227 = vld [vmem:[%s1 + $0x638] sm:$0xff]
    %v228 = vld [vmem:[%s1 + $0x640] sm:$0xff]
    %v229 = vld [vmem:[%s1 + $0x648] sm:$0xff]
    %v230 = vld [vmem:[%s1 + $0x650] sm:$0xff]
    %v231 = vld [vmem:[%s1 + $0x658] sm:$0xff]
    %v232 = vld [vmem:[%s1 + $0x660] sm:$0xff]
    %v233 = vld [vmem:[%s1 + $0x668] sm:$0xff]
    %v234 = vld [vmem:[%s1 + $0x670] sm:$0xff]
    %v235 = vld [vmem:[%s1 + $0x678] sm:$0xff]
    %v236 = vld [vmem:[%s1 + $0x680] sm:$0xff]
    %v237 = vld [vmem:[%s1 + $0x688] sm:$0xff]
    %v238 = vld [vmem:[%s1 + $0x690] sm:$0xff]
    %v239 = vld [vmem:[%s1 + $0x698] sm:$0xff]
    %v240 = vld [vmem:[%s1 + $0x6a0] sm:$0xff]
    %v241 = vld [vmem:[%s1 + $0x6a8] sm:$0xff]
    %v242 = vld [vmem:[%s1 + $0x6b0] sm:$0xff]
    %v243 = vld [vmem:[%s1 + $0x6b8] sm:$0xff]
    %v244 = vld [vmem:[%s1 + $0x6c0] sm:$0xff]
    %v245 = vld [vmem:[%s1 + $0x6c8] sm:$0xff]
    %v246 = vld [vmem:[%s1 + $0x6d0] sm:$0xff]
    %v247 = vld [vmem:[%s1 + $0x6d8] sm:$0xff]
    %v248 = vld [vmem:[%s1 + $0x6e0] sm:$0xff]
    %v249 = vld [vmem:[%s1 + $0x6e8] sm:$0xff]
    %v250 = vld [vmem:[%s1 + $0x6f0] sm:$0xff]
    %v251 = vld [vmem:[%s1 + $0x6f8] sm:$0xff]
    %v252 = vld [vmem:[%s1 + $0x700] sm:$0xff]
    %v253 = vld [vmem:[%s1 + $0x708] sm:$0xff]
    %v254 = vld [vmem:[%s1 + $0x710] sm:$0xff]
    %v255 = vld [vmem:[%s1 + $0x718] sm:$0xff]
    %v256 = vld [vmem:[%s1 + $0x720] sm:$0xff]
    %v257 = vld [vmem:[%s1 + $0x728] sm:$0xff]
    %v258 = vld [vmem:[%s1 + $0x730] sm:$0xff]
    %v259 = vld [vmem:[%s1 + $0x738] sm:$0xff]
    %v260 = vld [vmem:[%s1 + $0x740] sm:$0xff]
    %v261 = vld [vmem:[%s1 + $0x748] sm:$0xff]
    %v262 = vld [vmem:[%s1 + $0x750] sm:$0xff]
    %v263 = vld [vmem:[%s1 + $0x758] sm:$0xff]
    %v264 = vld [vmem:[%s1 + $0x760] sm:$0xff]
    %v265 = vld [vmem:[%s1 + $0x768] sm:$0xff]
    %v266 = vld [vmem:[%s1 + $0x770] sm:$0xff]
    %v267 = vld [vmem:[%s1 + $0x778] sm:$0xff]
    %v268 = vld [vmem:[%s1 + $0x780] sm:$0xff]
    %v269 = vld [vmem:[%s1 + $0x788] sm:$0xff]
    %v270 = vld [vmem:[%s1 + $0x790] sm:$0xff]
    %v271 = vld [vmem:[%s1 + $0x798] sm:$0xff]
    %v272 = vld [vmem:[%s1 + $0x7a0] sm:$0xff]
    %v273 = vld [vmem:[%s1 + $0x7a8] sm:$0xff]
    %v274 = vld [vmem:[%s1 + $0x7b0] sm:$0xff]
    %v275 = vld [vmem:[%s1 + $0x7b8] sm:$0xff]
    %v276 = vld [vmem:[%s1 + $0x7c0] sm:$0xff]
    %v277 = vld [vmem:[%s1 + $0x7c8] sm:$0xff]
    %v278 = vld [vmem:[%s1 + $0x7d0] sm:$0xff]
    %v279 = vld [vmem:[%s1 + $0x7d8] sm:$0xff]
    %v280 = vld [vmem:[%s1 + $0x7e0] sm:$0xff]
    %v281 = vld [vmem:[%s1 + $0x7e8] sm:$0xff]
    %v282 = vld [vmem:[%s1 + $0x7f0] sm:$0xff]
    %v283 = vld [vmem:[%s1 + $0x7f8] sm:$0xff]
    %v284 = vld [vmem:[%s1 + $0x800] sm:$0xff]
    %v285 = vld [vmem:[%s1 + $0x808] sm:$0xff]
    %v286 = vld [vmem:[%s1 + $0x810] sm:$0xff]
    %v287 = vld [vmem:[%s1 + $0x818] sm:$0xff]
    %v288 = vld [vmem:[%s1 + $0x820] sm:$0xff]
    %v289 = vld [vmem:[%s1 + $0x828] sm:$0xff]
    %v290 = vld [vmem:[%s1 + $0x830] sm:$0xff]
    %v291 = vld [vmem:[%s1 + $0x838] sm:$0xff]
    %v292 = vld [vmem:[%s1 + $0x840] sm:$0xff]
    %v293 = vld [vmem:[%s1 + $0x848] sm:$0xff]
    %v294 = vld [vmem:[%s1 + $0x850] sm:$0xff]
    %v295 = vld [vmem:[%s1 + $0x858] sm:$0xff]
    %v296 = vld [vmem:[%s1 + $0x860] sm:$0xff]
    %v297 = vld [vmem:[%s1 + $0x868] sm:$0xff]
    %v298 = vld [vmem:[%s1 + $0x870] sm:$0xff]
    %v299 = vld [vmem:[%s1 + $0x878] sm:$0xff]
    %v300 = vld [vmem:[%s1 + $0x880] sm:$0xff]
    %v301 = vld [vmem:[%s1 + $0x888] sm:$0xff]
    %v302 = vld [vmem:[%s1 + $0x890] sm:$0xff]
    %v303 = vld [vmem:[%s1 + $0x898] sm:$0xff]
    %v304 = vld [vmem:[%s1 + $0x8a0] sm:$0xff]
    %v305 = vld [vmem:[%s1 + $0x8a8] sm:$0xff]
    %v306 = vld [vmem:[%s1 + $0x8b0] sm:$0xff]
    %v307 = vld [vmem:[%s1 + $0x8b8] sm:$0xff]
    %v308 = vld [vmem:[%s1 + $0x8c0] sm:$0xff]
    %v309 = vld [vmem:[%s1 + $0x8c8] sm:$0xff]
    %v310 = vld [vmem:[%s1 + $0x8d0] sm:$0xff]
    %v311 = vld [vmem:[%s1 + $0x8d8] sm:$0xff]
    %v312 = vld [vmem:[%s1 + $0x8e0] sm:$0xff]
    %v313 = vld [vmem:[%s1 + $0x8e8] sm:$0xff]
    %v314 = vld [vmem:[%s1 + $0x8f0] sm:$0xff]
    %v315 = vld [vmem:[%s1 + $0x8f8] sm:$0xff]
    %v316 = vld [vmem:[%s1 + $0x900] sm:$0xff]
    %v317 = vld [vmem:[%s1 + $0x908] sm:$0xff]
    %v318 = vld [vmem:[%s1 + $0x910] sm:$0xff]
    %v319 = vld [vmem:[%s1 + $0x918] sm:$0xff]
    %v320 = vld [vmem:[%s1 + $0x920] sm:$0xff]
    %v321 = vld [vmem:[%s1 + $0x928] sm:$0xff]
    %v322 = vld [vmem:[%s1 + $0x930] sm:$0xff]
    %v323 = vld [vmem:[%s1 + $0x938] sm:$0xff]
    %v324 = vld [vmem:[%s1 + $0x940] sm:$0xff]
    %v325 = vld [vmem:[%s1 + $0x948] sm:$0xff]
    %v326 = vld [vmem:[%s1 + $0x950] sm:$0xff]
    %v327 = vld [vmem:[%s1 + $0x958] sm:$0xff]
    %v328 = vld [vmem:[%s1 + $0x960] sm:$0xff]
    %v329 = vld [vmem:[%s1 + $0x968] sm:$0xff]
    %v330 = vld [vmem:[%s1 + $0x970] sm:$0xff]
    %v331 = vld [vmem:[%s1 + $0x978] sm:$0xff]
    %v332 = vld [vmem:[%s1 + $0x980] sm:$0xff]
    %v333 = vld [vmem:[%s1 + $0x988] sm:$0xff]
    %v334 = vld [vmem:[%s1 + $0x990] sm:$0xff]
    %v335 = vld [vmem:[%s1 + $0x998] sm:$0xff]
    %v336 = vld [vmem:[%s1 + $0x9a0] sm:$0xff]
    %v337 = vld [vmem:[%s1 + $0x9a8] sm:$0xff]
    %v338 = vld [vmem:[%s1 + $0x9b0] sm:$0xff]
    %v339 = vld [vmem:[%s1 + $0x9b8] sm:$0xff]
    %v340 = vld [vmem:[%s1 + $0x9c0] sm:$0xff]
    %v341 = vld [vmem:[%s1 + $0x9c8] sm:$0xff]
    %v342 = vld [vmem:[%s1 + $0x9d0] sm:$0xff]
    %v343 = vld [vmem:[%s1 + $0x9d8] sm:$0xff]
    %v344 = vld [vmem:[%s1 + $0x9e0] sm:$0xff]
    %v345 = vld [vmem:[%s1 + $0x9e8] sm:$0xff]
    %v346 = vld [vmem:[%s1 + $0x9f0] sm:$0xff]
    %v347 = vld [vmem:[%s1 + $0x9f8] sm:$0xff]
    %v348 = vld [vmem:[%s1 + $0xa00] sm:$0xff]
    %v349 = vld [vmem:[%s1 + $0xa08] sm:$0xff]
    %v350 = vld [vmem:[%s1 + $0xa10] sm:$0xff]
    %v351 = vld [vmem:[%s1 + $0xa18] sm:$0xff]
    %v352 = vld [vmem:[%s1 + $0xa20] sm:$0xff]
    %v353 = vld [vmem:[%s1 + $0xa28] sm:$0xff]
    %v354 = vld [vmem:[%s1 + $0xa30] sm:$0xff]
    %v355 = vld [vmem:[%s1 + $0xa38] sm:$0xff]
    %v356 = vld [vmem:[%s1 + $0xa40] sm:$0xff]
    %v357 = vld [vmem:[%s1 + $0xa48] sm:$0xff]
    %v358 = vld [vmem:[%s1 + $0xa50] sm:$0xff]
    %v359 = vld [vmem:[%s1 + $0xa58] sm:$0xff]
    %v360 = vld [vmem:[%s1 + $0xa60] sm:$0xff]
    %v361 = vld [vmem:[%s1 + $0xa68] sm:$0xff]
    %v362 = vld [vmem:[%s1 + $0xa70] sm:$0xff]
    %v363 = vld [vmem:[%s1 + $0xa78] sm:$0xff]
    %v364 = vld [vmem:[%s1 + $0xa80] sm:$0xff]
    %v365 = vld [vmem:[%s1 + $0xa88] sm:$0xff]
    %v366 = vld [vmem:[%s1 + $0xa90] sm:$0xff]
    %v367 = vld [vmem:[%s1 + $0xa98] sm:$0xff]
    %v368 = vld [vmem:[%s1 + $0xaa0] sm:$0xff]
    %v369 = vld [vmem:[%s1 + $0xaa8] sm:$0xff]
    %v370 = vld [vmem:[%s1 + $0xab0] sm:$0xff]
    %v371 = vld [vmem:[%s1 + $0xab8] sm:$0xff]
    %v372 = vld [vmem:[%s1 + $0xac0] sm:$0xff]
    %v373 = vld [vmem:[%s1 + $0xac8] sm:$0xff]
    %v374 = vld [vmem:[%s1 + $0xad0] sm:$0xff]
    %v375 = vld [vmem:[%s1 + $0xad8] sm:$0xff]
    %v376 = vld [vmem:[%s1 + $0xae0] sm:$0xff]
    %v377 = vld [vmem:[%s1 + $0xae8] sm:$0xff]
    %v378 = vld [vmem:[%s1 + $0xaf0] sm:$0xff]
    %v379 = vld [vmem:[%s1 + $0xaf8] sm:$0xff]
    %v380 = vld [vmem:[%s1 + $0xb00] sm:$0xff]
    %v381 = vld [vmem:[%s1 + $0xb08] sm:$0xff]
    %v382 = vld [vmem:[%s1 + $0xb10] sm:$0xff]
    %v383 = vld [vmem:[%s1 + $0xb18] sm:$0xff]
    %v384 = vld [vmem:[%s1 + $0xb20] sm:$0xff]
    %v385 = vld [vmem:[%s1 + $0xb28] sm:$0xff]
    %v386 = vld [vmem:[%s1 + $0xb30] sm:$0xff]
    %v387 = vld [vmem:[%s1 + $0xb38] sm:$0xff]
    %v388 = vld [vmem:[%s1 + $0xb40] sm:$0xff]
    %v389 = vld [vmem:[%s1 + $0xb48] sm:$0xff]
    %v390 = vld [vmem:[%s1 + $0xb50] sm:$0xff]
    %v391 = vld [vmem:[%s1 + $0xb58] sm:$0xff]
    %v392 = vld [vmem:[%s1 + $0xb60] sm:$0xff]
    %v393 = vld [vmem:[%s1 + $0xb68] sm:$0xff]
    %v394 = vld [vmem:[%s1 + $0xb70] sm:$0xff]
    %v395 = vld [vmem:[%s1 + $0xb78] sm:$0xff]
    %v396 = vld [vmem:[%s1 + $0xb80] sm:$0xff]
    %v397 = vld [vmem:[%s1 + $0xb88] sm:$0xff]
    %v398 = vld [vmem:[%s1 + $0xb90] sm:$0xff]
    %v399 = vld [vmem:[%s1 + $0xb98] sm:$0xff]
    %v400 = vld [vmem:[%s1 + $0xba0] sm:$0xff]
    %v401 = vld [vmem:[%s1 + $0xba8] sm:$0xff]
    %v402 = vld [vmem:[%s1 + $0xbb0] sm:$0xff]
    %v403 = vld [vmem:[%s1 + $0xbb8] sm:$0xff]
    %v404 = vld [vmem:[%s1 + $0xbc0] sm:$0xff]
    %v405 = vld [vmem:[%s1 + $0xbc8] sm:$0xff]
    %v406 = vld [vmem:[%s1 + $0xbd0] sm:$0xff]
    %v407 = vld [vmem:[%s1 + $0xbd8] sm:$0xff]
    %v408 = vld [vmem:[%s1 + $0xbe0] sm:$0xff]
    %v409 = vld [vmem:[%s1 + $0xbe8] sm:$0xff]
    %v410 = vld [vmem:[%s1 + $0xbf0] sm:$0xff]
    %v411 = vld [vmem:[%s1 + $0xbf8] sm:$0xff]
    %v412 = vld [vmem:[%s5] ss:$4 sm:$0x3]
    %v414 = vlaneseq
    %v415 = vshrl.u32 %v414, 7
    %v416 = vsub.s32 0, %v415
    %v417 = vrot.slane %v412, %v416
    %v418 = vlaneseq
    %v419 = vshrl.u32 %v418, 7
    %v420 = vsub.s32 1, %v419
    %v421 = vrot.slane %v412, %v420
    %v427 = vcombine.high %v25, %v25
    %v429 = vunpack.c.l.s4 1966171168
    %v430 = vunpack.c.0.s8 %v429
    %v431 = vlaneseq
    %v432 = vshrl.u32 %v431, 7
    %v433 = vsub.s32 %v430, %v432
    %v434 = vrot.slane %v25, %v433
    %v436 = vunpack.c.l.s4 1966171168
    %v437 = vunpack.c.0.s8 %v436
    %v438 = vlaneseq
    %v439 = vshrl.u32 %v438, 7
    %v440 = vsub.s32 %v437, %v439
    %v441 = vrot.slane %v427, %v440
    %v442 = vcombine.high %v434, %v434
    %v443 = vcombine.high %v441, %v441
    %v445 = vunpack.c.l.s4 1966171168
    %v446 = vunpack.c.0.s8 %v445
    %v447 = vlaneseq
    %v448 = vshrl.u32 %v447, 7
    %v449 = vsub.s32 %v446, %v448
    %v450 = vrot.slane %v434, %v449
    %v452 = vunpack.c.l.s4 1966171168
    %v453 = vunpack.c.0.s8 %v452
    %v454 = vlaneseq
    %v455 = vshrl.u32 %v454, 7
    %v456 = vsub.s32 %v453, %v455
    %v457 = vrot.slane %v441, %v456
    %v459 = vunpack.c.l.s4 1966171168
    %v460 = vunpack.c.0.s8 %v459
    %v461 = vlaneseq
    %v462 = vshrl.u32 %v461, 7
    %v463 = vsub.s32 %v460, %v462
    %v464 = vrot.slane %v442, %v463
    %v466 = vunpack.c.l.s4 1966171168
    %v467 = vunpack.c.0.s8 %v466
    %v468 = vlaneseq
    %v469 = vshrl.u32 %v468, 7
    %v470 = vsub.s32 %v467, %v469
    %v471 = vrot.slane %v443, %v470
    %v472 = vcombine.high %v450, %v450
    %v473 = vcombine.high %v457, %v457
    %v474 = vcombine.high %v464, %v464
    %v475 = vcombine.high %v471, %v471
    %v476 = vcombine.high %v26, %v26
    %v478 = vunpack.c.l.s4 1966171168
    %v479 = vunpack.c.0.s8 %v478
    %v480 = vlaneseq
    %v481 = vshrl.u32 %v480, 7
    %v482 = vsub.s32 %v479, %v481
    %v483 = vrot.slane %v26, %v482
    %v485 = vunpack.c.l.s4 1966171168
    %v486 = vunpack.c.0.s8 %v485
    %v487 = vlaneseq
    %v488 = vshrl.u32 %v487, 7
    %v489 = vsub.s32 %v486, %v488
    %v490 = vrot.slane %v476, %v489
    %v491 = vcombine.high %v483, %v483
    %v492 = vcombine.high %v490, %v490
    %v494 = vunpack.c.l.s4 1966171168
    %v495 = vunpack.c.0.s8 %v494
    %v496 = vlaneseq
    %v497 = vshrl.u32 %v496, 7
    %v498 = vsub.s32 %v495, %v497
    %v499 = vrot.slane %v483, %v498
    %v501 = vunpack.c.l.s4 1966171168
    %v502 = vunpack.c.0.s8 %v501
    %v503 = vlaneseq
    %v504 = vshrl.u32 %v503, 7
    %v505 = vsub.s32 %v502, %v504
    %v506 = vrot.slane %v490, %v505
    %v508 = vunpack.c.l.s4 1966171168
    %v509 = vunpack.c.0.s8 %v508
    %v510 = vlaneseq
    %v511 = vshrl.u32 %v510, 7
    %v512 = vsub.s32 %v509, %v511
    %v513 = vrot.slane %v491, %v512
    %v515 = vunpack.c.l.s4 1966171168
    %v516 = vunpack.c.0.s8 %v515
    %v517 = vlaneseq
    %v518 = vshrl.u32 %v517, 7
    %v519 = vsub.s32 %v516, %v518
    %v520 = vrot.slane %v492, %v519
    %v521 = vcombine.high %v499, %v499
    %v522 = vcombine.high %v506, %v506
    %v523 = vcombine.high %v513, %v513
    %v524 = vcombine.high %v520, %v520
    %v525 = vcombine.high %v27, %v27
    %v527 = vunpack.c.l.s4 1966171168
    %v528 = vunpack.c.0.s8 %v527
    %v529 = vlaneseq
    %v530 = vshrl.u32 %v529, 7
    %v531 = vsub.s32 %v528, %v530
    %v532 = vrot.slane %v27, %v531
    %v534 = vunpack.c.l.s4 1966171168
    %v535 = vunpack.c.0.s8 %v534
    %v536 = vlaneseq
    %v537 = vshrl.u32 %v536, 7
    %v538 = vsub.s32 %v535, %v537
    %v539 = vrot.slane %v525, %v538
    %v540 = vcombine.high %v532, %v532
    %v541 = vcombine.high %v539, %v539
    %v543 = vunpack.c.l.s4 1966171168
    %v544 = vunpack.c.0.s8 %v543
    %v545 = vlaneseq
    %v546 = vshrl.u32 %v545, 7
    %v547 = vsub.s32 %v544, %v546
    %v548 = vrot.slane %v532, %v547
    %v550 = vunpack.c.l.s4 1966171168
    %v551 = vunpack.c.0.s8 %v550
    %v552 = vlaneseq
    %v553 = vshrl.u32 %v552, 7
    %v554 = vsub.s32 %v551, %v553
    %v555 = vrot.slane %v539, %v554
    %v557 = vunpack.c.l.s4 1966171168
    %v558 = vunpack.c.0.s8 %v557
    %v559 = vlaneseq
    %v560 = vshrl.u32 %v559, 7
    %v561 = vsub.s32 %v558, %v560
    %v562 = vrot.slane %v540, %v561
    %v564 = vunpack.c.l.s4 1966171168
    %v565 = vunpack.c.0.s8 %v564
    %v566 = vlaneseq
    %v567 = vshrl.u32 %v566, 7
    %v568 = vsub.s32 %v565, %v567
    %v569 = vrot.slane %v541, %v568
    %v570 = vcombine.high %v548, %v548
    %v571 = vcombine.high %v555, %v555
    %v572 = vcombine.high %v562, %v562
    %v573 = vcombine.high %v569, %v569
    %v982 = vunpack.c.l.b16 %v28
    %v983 = vunpack.c.h.b16 %v28
    %v984 = vunpack.c.l.b16 %v29
    %v985 = vunpack.c.h.b16 %v29
    %v986 = vunpack.c.l.b16 %v30
    %v987 = vunpack.c.h.b16 %v30
    %v988 = vunpack.c.l.b16 %v31
    %v989 = vunpack.c.h.b16 %v31
    %v990 = vunpack.c.l.b16 %v32
    %v991 = vunpack.c.h.b16 %v32
    %v992 = vunpack.c.l.b16 %v33
    %v993 = vunpack.c.h.b16 %v33
    %v994 = vunpack.c.l.b16 %v34
    %v995 = vunpack.c.h.b16 %v34
    %v996 = vunpack.c.l.b16 %v35
    %v997 = vunpack.c.h.b16 %v35
    %v998 = vunpack.c.l.b16 %v36
    %v999 = vunpack.c.h.b16 %v36
    %v1000 = vunpack.c.l.b16 %v37
    %v1001 = vunpack.c.h.b16 %v37
    %v1002 = vunpack.c.l.b16 %v38
    %v1003 = vunpack.c.h.b16 %v38
    %v1004 = vunpack.c.l.b16 %v39
    %v1005 = vunpack.c.h.b16 %v39
    %v1006 = vunpack.c.l.b16 %v40
    %v1007 = vunpack.c.h.b16 %v40
    %v1008 = vunpack.c.l.b16 %v41
    %v1009 = vunpack.c.h.b16 %v41
    %v1010 = vunpack.c.l.b16 %v42
    %v1011 = vunpack.c.h.b16 %v42
    %v1012 = vunpack.c.l.b16 %v43
    %v1013 = vunpack.c.h.b16 %v43
    %v1014 = vunpack.c.l.b16 %v44
    %v1015 = vunpack.c.h.b16 %v44
    %v1016 = vunpack.c.l.b16 %v45
    %v1017 = vunpack.c.h.b16 %v45
    %v1018 = vunpack.c.l.b16 %v46
    %v1019 = vunpack.c.h.b16 %v46
    %v1020 = vunpack.c.l.b16 %v47
    %v1021 = vunpack.c.h.b16 %v47
    %v1022 = vunpack.c.l.b16 %v48
    %v1023 = vunpack.c.h.b16 %v48
    %v1024 = vunpack.c.l.b16 %v49
    %v1025 = vunpack.c.h.b16 %v49
    %v1026 = vunpack.c.l.b16 %v50
    %v1027 = vunpack.c.h.b16 %v50
    %v1028 = vunpack.c.l.b16 %v51
    %v1029 = vunpack.c.h.b16 %v51
    %v1030 = vunpack.c.l.b16 %v52
    %v1031 = vunpack.c.h.b16 %v52
    %v1032 = vunpack.c.l.b16 %v53
    %v1033 = vunpack.c.h.b16 %v53
    %v1034 = vunpack.c.l.b16 %v54
    %v1035 = vunpack.c.h.b16 %v54
    %v1036 = vunpack.c.l.b16 %v55
    %v1037 = vunpack.c.h.b16 %v55
    %v1038 = vunpack.c.l.b16 %v56
    %v1039 = vunpack.c.h.b16 %v56
    %v1040 = vunpack.c.l.b16 %v57
    %v1041 = vunpack.c.h.b16 %v57
    %v1042 = vunpack.c.l.b16 %v58
    %v1043 = vunpack.c.h.b16 %v58
    %v1044 = vunpack.c.l.b16 %v59
    %v1045 = vunpack.c.h.b16 %v59
    %v1046 = vunpack.c.l.b16 %v60
    %v1047 = vunpack.c.h.b16 %v60
    %v1048 = vunpack.c.l.b16 %v61
    %v1049 = vunpack.c.h.b16 %v61
    %v1050 = vunpack.c.l.b16 %v62
    %v1051 = vunpack.c.h.b16 %v62
    %v1052 = vunpack.c.l.b16 %v63
    %v1053 = vunpack.c.h.b16 %v63
    %v1054 = vunpack.c.l.b16 %v64
    %v1055 = vunpack.c.h.b16 %v64
    %v1056 = vunpack.c.l.b16 %v65
    %v1057 = vunpack.c.h.b16 %v65
    %v1058 = vunpack.c.l.b16 %v66
    %v1059 = vunpack.c.h.b16 %v66
    %v1060 = vunpack.c.l.b16 %v67
    %v1061 = vunpack.c.h.b16 %v67
    %v1062 = vunpack.c.l.b16 %v68
    %v1063 = vunpack.c.h.b16 %v68
    %v1064 = vunpack.c.l.b16 %v69
    %v1065 = vunpack.c.h.b16 %v69
    %v1066 = vunpack.c.l.b16 %v70
    %v1067 = vunpack.c.h.b16 %v70
    %v1068 = vunpack.c.l.b16 %v71
    %v1069 = vunpack.c.h.b16 %v71
    %v1070 = vunpack.c.l.b16 %v72
    %v1071 = vunpack.c.h.b16 %v72
    %v1072 = vunpack.c.l.b16 %v73
    %v1073 = vunpack.c.h.b16 %v73
    %v1074 = vunpack.c.l.b16 %v74
    %v1075 = vunpack.c.h.b16 %v74
    %v1076 = vunpack.c.l.b16 %v75
    %v1077 = vunpack.c.h.b16 %v75
    %v1078 = vunpack.c.l.b16 %v76
    %v1079 = vunpack.c.h.b16 %v76
    %v1080 = vunpack.c.l.b16 %v77
    %v1081 = vunpack.c.h.b16 %v77
    %v1082 = vunpack.c.l.b16 %v78
    %v1083 = vunpack.c.h.b16 %v78
    %v1084 = vunpack.c.l.b16 %v79
    %v1085 = vunpack.c.h.b16 %v79
    %v1086 = vunpack.c.l.b16 %v80
    %v1087 = vunpack.c.h.b16 %v80
    %v1088 = vunpack.c.l.b16 %v81
    %v1089 = vunpack.c.h.b16 %v81
    %v1090 = vunpack.c.l.b16 %v82
    %v1091 = vunpack.c.h.b16 %v82
    %v1092 = vunpack.c.l.b16 %v83
    %v1093 = vunpack.c.h.b16 %v83
    %v1094 = vunpack.c.l.b16 %v84
    %v1095 = vunpack.c.h.b16 %v84
    %v1096 = vunpack.c.l.b16 %v85
    %v1097 = vunpack.c.h.b16 %v85
    %v1098 = vunpack.c.l.b16 %v86
    %v1099 = vunpack.c.h.b16 %v86
    %v1100 = vunpack.c.l.b16 %v87
    %v1101 = vunpack.c.h.b16 %v87
    %v1102 = vunpack.c.l.b16 %v88
    %v1103 = vunpack.c.h.b16 %v88
    %v1104 = vunpack.c.l.b16 %v89
    %v1105 = vunpack.c.h.b16 %v89
    %v1106 = vunpack.c.l.b16 %v90
    %v1107 = vunpack.c.h.b16 %v90
    %v1108 = vunpack.c.l.b16 %v91
    %v1109 = vunpack.c.h.b16 %v91
    %v1110 = vunpack.c.l.b16 %v92
    %v1111 = vunpack.c.h.b16 %v92
    %v1112 = vunpack.c.l.b16 %v93
    %v1113 = vunpack.c.h.b16 %v93
    %v1114 = vunpack.c.l.b16 %v94
    %v1115 = vunpack.c.h.b16 %v94
    %v1116 = vunpack.c.l.b16 %v95
    %v1117 = vunpack.c.h.b16 %v95
    %v1118 = vunpack.c.l.b16 %v96
    %v1119 = vunpack.c.h.b16 %v96
    %v1120 = vunpack.c.l.b16 %v97
    %v1121 = vunpack.c.h.b16 %v97
    %v1122 = vunpack.c.l.b16 %v98
    %v1123 = vunpack.c.h.b16 %v98
    %v1124 = vunpack.c.l.b16 %v99
    %v1125 = vunpack.c.h.b16 %v99
    %v1126 = vunpack.c.l.b16 %v100
    %v1127 = vunpack.c.h.b16 %v100
    %v1128 = vunpack.c.l.b16 %v101
    %v1129 = vunpack.c.h.b16 %v101
    %v1130 = vunpack.c.l.b16 %v102
    %v1131 = vunpack.c.h.b16 %v102
    %v1132 = vunpack.c.l.b16 %v103
    %v1133 = vunpack.c.h.b16 %v103
    %v1134 = vunpack.c.l.b16 %v104
    %v1135 = vunpack.c.h.b16 %v104
    %v1136 = vunpack.c.l.b16 %v105
    %v1137 = vunpack.c.h.b16 %v105
    %v1138 = vunpack.c.l.b16 %v106
    %v1139 = vunpack.c.h.b16 %v106
    %v1140 = vunpack.c.l.b16 %v107
    %v1141 = vunpack.c.h.b16 %v107
    %v1142 = vunpack.c.l.b16 %v108
    %v1143 = vunpack.c.h.b16 %v108
    %v1144 = vunpack.c.l.b16 %v109
    %v1145 = vunpack.c.h.b16 %v109
    %v1146 = vunpack.c.l.b16 %v110
    %v1147 = vunpack.c.h.b16 %v110
    %v1148 = vunpack.c.l.b16 %v111
    %v1149 = vunpack.c.h.b16 %v111
    %v1150 = vunpack.c.l.b16 %v112
    %v1151 = vunpack.c.h.b16 %v112
    %v1152 = vunpack.c.l.b16 %v113
    %v1153 = vunpack.c.h.b16 %v113
    %v1154 = vunpack.c.l.b16 %v114
    %v1155 = vunpack.c.h.b16 %v114
    %v1156 = vunpack.c.l.b16 %v115
    %v1157 = vunpack.c.h.b16 %v115
    %v1158 = vunpack.c.l.b16 %v116
    %v1159 = vunpack.c.h.b16 %v116
    %v1160 = vunpack.c.l.b16 %v117
    %v1161 = vunpack.c.h.b16 %v117
    %v1162 = vunpack.c.l.b16 %v118
    %v1163 = vunpack.c.h.b16 %v118
    %v1164 = vunpack.c.l.b16 %v119
    %v1165 = vunpack.c.h.b16 %v119
    %v1166 = vunpack.c.l.b16 %v120
    %v1167 = vunpack.c.h.b16 %v120
    %v1168 = vunpack.c.l.b16 %v121
    %v1169 = vunpack.c.h.b16 %v121
    %v1170 = vunpack.c.l.b16 %v122
    %v1171 = vunpack.c.h.b16 %v122
    %v1172 = vunpack.c.l.b16 %v123
    %v1173 = vunpack.c.h.b16 %v123
    %v1174 = vunpack.c.l.b16 %v124
    %v1175 = vunpack.c.h.b16 %v124
    %v1176 = vunpack.c.l.b16 %v125
    %v1177 = vunpack.c.h.b16 %v125
    %v1178 = vunpack.c.l.b16 %v126
    %v1179 = vunpack.c.h.b16 %v126
    %v1180 = vunpack.c.l.b16 %v127
    %v1181 = vunpack.c.h.b16 %v127
    %v1182 = vunpack.c.l.b16 %v128
    %v1183 = vunpack.c.h.b16 %v128
    %v1184 = vunpack.c.l.b16 %v129
    %v1185 = vunpack.c.h.b16 %v129
    %v1186 = vunpack.c.l.b16 %v130
    %v1187 = vunpack.c.h.b16 %v130
    %v1188 = vunpack.c.l.b16 %v131
    %v1189 = vunpack.c.h.b16 %v131
    %v1190 = vunpack.c.l.b16 %v132
    %v1191 = vunpack.c.h.b16 %v132
    %v1192 = vunpack.c.l.b16 %v133
    %v1193 = vunpack.c.h.b16 %v133
    %v1194 = vunpack.c.l.b16 %v134
    %v1195 = vunpack.c.h.b16 %v134
    %v1196 = vunpack.c.l.b16 %v135
    %v1197 = vunpack.c.h.b16 %v135
    %v1198 = vunpack.c.l.b16 %v136
    %v1199 = vunpack.c.h.b16 %v136
    %v1200 = vunpack.c.l.b16 %v137
    %v1201 = vunpack.c.h.b16 %v137
    %v1202 = vunpack.c.l.b16 %v138
    %v1203 = vunpack.c.h.b16 %v138
    %v1204 = vunpack.c.l.b16 %v139
    %v1205 = vunpack.c.h.b16 %v139
    %v1206 = vunpack.c.l.b16 %v140
    %v1207 = vunpack.c.h.b16 %v140
    %v1208 = vunpack.c.l.b16 %v141
    %v1209 = vunpack.c.h.b16 %v141
    %v1210 = vunpack.c.l.b16 %v142
    %v1211 = vunpack.c.h.b16 %v142
    %v1212 = vunpack.c.l.b16 %v143
    %v1213 = vunpack.c.h.b16 %v143
    %v1214 = vunpack.c.l.b16 %v144
    %v1215 = vunpack.c.h.b16 %v144
    %v1216 = vunpack.c.l.b16 %v145
    %v1217 = vunpack.c.h.b16 %v145
    %v1218 = vunpack.c.l.b16 %v146
    %v1219 = vunpack.c.h.b16 %v146
    %v1220 = vunpack.c.l.b16 %v147
    %v1221 = vunpack.c.h.b16 %v147
    %v1222 = vunpack.c.l.b16 %v148
    %v1223 = vunpack.c.h.b16 %v148
    %v1224 = vunpack.c.l.b16 %v149
    %v1225 = vunpack.c.h.b16 %v149
    %v1226 = vunpack.c.l.b16 %v150
    %v1227 = vunpack.c.h.b16 %v150
    %v1228 = vunpack.c.l.b16 %v151
    %v1229 = vunpack.c.h.b16 %v151
    %v1230 = vunpack.c.l.b16 %v152
    %v1231 = vunpack.c.h.b16 %v152
    %v1232 = vunpack.c.l.b16 %v153
    %v1233 = vunpack.c.h.b16 %v153
    %v1234 = vunpack.c.l.b16 %v154
    %v1235 = vunpack.c.h.b16 %v154
    %v1236 = vunpack.c.l.b16 %v155
    %v1237 = vunpack.c.h.b16 %v155
    %v1238 = vunpack.c.l.b16 %v156
    %v1239 = vunpack.c.h.b16 %v156
    %v1240 = vunpack.c.l.b16 %v157
    %v1241 = vunpack.c.h.b16 %v157
    %v1242 = vunpack.c.l.b16 %v158
    %v1243 = vunpack.c.h.b16 %v158
    %v1244 = vunpack.c.l.b16 %v159
    %v1245 = vunpack.c.h.b16 %v159
    %v1246 = vunpack.c.l.b16 %v160
    %v1247 = vunpack.c.h.b16 %v160
    %v1248 = vunpack.c.l.b16 %v161
    %v1249 = vunpack.c.h.b16 %v161
    %v1250 = vunpack.c.l.b16 %v162
    %v1251 = vunpack.c.h.b16 %v162
    %v1252 = vunpack.c.l.b16 %v163
    %v1253 = vunpack.c.h.b16 %v163
    %v1254 = vunpack.c.l.b16 %v164
    %v1255 = vunpack.c.h.b16 %v164
    %v1256 = vunpack.c.l.b16 %v165
    %v1257 = vunpack.c.h.b16 %v165
    %v1258 = vunpack.c.l.b16 %v166
    %v1259 = vunpack.c.h.b16 %v166
    %v1260 = vunpack.c.l.b16 %v167
    %v1261 = vunpack.c.h.b16 %v167
    %v1262 = vunpack.c.l.b16 %v168
    %v1263 = vunpack.c.h.b16 %v168
    %v1264 = vunpack.c.l.b16 %v169
    %v1265 = vunpack.c.h.b16 %v169
    %v1266 = vunpack.c.l.b16 %v170
    %v1267 = vunpack.c.h.b16 %v170
    %v1268 = vunpack.c.l.b16 %v171
    %v1269 = vunpack.c.h.b16 %v171
    %v1270 = vunpack.c.l.b16 %v172
    %v1271 = vunpack.c.h.b16 %v172
    %v1272 = vunpack.c.l.b16 %v173
    %v1273 = vunpack.c.h.b16 %v173
    %v1274 = vunpack.c.l.b16 %v174
    %v1275 = vunpack.c.h.b16 %v174
    %v1276 = vunpack.c.l.b16 %v175
    %v1277 = vunpack.c.h.b16 %v175
    %v1278 = vunpack.c.l.b16 %v176
    %v1279 = vunpack.c.h.b16 %v176
    %v1280 = vunpack.c.l.b16 %v177
    %v1281 = vunpack.c.h.b16 %v177
    %v1282 = vunpack.c.l.b16 %v178
    %v1283 = vunpack.c.h.b16 %v178
    %v1284 = vunpack.c.l.b16 %v179
    %v1285 = vunpack.c.h.b16 %v179
    %v1286 = vunpack.c.l.b16 %v180
    %v1287 = vunpack.c.h.b16 %v180
    %v1288 = vunpack.c.l.b16 %v181
    %v1289 = vunpack.c.h.b16 %v181
    %v1290 = vunpack.c.l.b16 %v182
    %v1291 = vunpack.c.h.b16 %v182
    %v1292 = vunpack.c.l.b16 %v183
    %v1293 = vunpack.c.h.b16 %v183
    %v1294 = vunpack.c.l.b16 %v184
    %v1295 = vunpack.c.h.b16 %v184
    %v1296 = vunpack.c.l.b16 %v185
    %v1297 = vunpack.c.h.b16 %v185
    %v1298 = vunpack.c.l.b16 %v186
    %v1299 = vunpack.c.h.b16 %v186
    %v1300 = vunpack.c.l.b16 %v187
    %v1301 = vunpack.c.h.b16 %v187
    %v1302 = vunpack.c.l.b16 %v188
    %v1303 = vunpack.c.h.b16 %v188
    %v1304 = vunpack.c.l.b16 %v189
    %v1305 = vunpack.c.h.b16 %v189
    %v1306 = vunpack.c.l.b16 %v190
    %v1307 = vunpack.c.h.b16 %v190
    %v1308 = vunpack.c.l.b16 %v191
    %v1309 = vunpack.c.h.b16 %v191
    %v1310 = vunpack.c.l.b16 %v192
    %v1311 = vunpack.c.h.b16 %v192
    %v1312 = vunpack.c.l.b16 %v193
    %v1313 = vunpack.c.h.b16 %v193
    %v1314 = vunpack.c.l.b16 %v194
    %v1315 = vunpack.c.h.b16 %v194
    %v1316 = vunpack.c.l.b16 %v195
    %v1317 = vunpack.c.h.b16 %v195
    %v1318 = vunpack.c.l.b16 %v196
    %v1319 = vunpack.c.h.b16 %v196
    %v1320 = vunpack.c.l.b16 %v197
    %v1321 = vunpack.c.h.b16 %v197
    %v1322 = vunpack.c.l.b16 %v198
    %v1323 = vunpack.c.h.b16 %v198
    %v1324 = vunpack.c.l.b16 %v199
    %v1325 = vunpack.c.h.b16 %v199
    %v1326 = vunpack.c.l.b16 %v200
    %v1327 = vunpack.c.h.b16 %v200
    %v1328 = vunpack.c.l.b16 %v201
    %v1329 = vunpack.c.h.b16 %v201
    %v1330 = vunpack.c.l.b16 %v202
    %v1331 = vunpack.c.h.b16 %v202
    %v1332 = vunpack.c.l.b16 %v203
    %v1333 = vunpack.c.h.b16 %v203
    %v1334 = vunpack.c.l.b16 %v204
    %v1335 = vunpack.c.h.b16 %v204
    %v1336 = vunpack.c.l.b16 %v205
    %v1337 = vunpack.c.h.b16 %v205
    %v1338 = vunpack.c.l.b16 %v206
    %v1339 = vunpack.c.h.b16 %v206
    %v1340 = vunpack.c.l.b16 %v207
    %v1341 = vunpack.c.h.b16 %v207
    %v1342 = vunpack.c.l.b16 %v208
    %v1343 = vunpack.c.h.b16 %v208
    %v1344 = vunpack.c.l.b16 %v209
    %v1345 = vunpack.c.h.b16 %v209
    %v1346 = vunpack.c.l.b16 %v210
    %v1347 = vunpack.c.h.b16 %v210
    %v1348 = vunpack.c.l.b16 %v211
    %v1349 = vunpack.c.h.b16 %v211
    %v1350 = vunpack.c.l.b16 %v212
    %v1351 = vunpack.c.h.b16 %v212
    %v1352 = vunpack.c.l.b16 %v213
    %v1353 = vunpack.c.h.b16 %v213
    %v1354 = vunpack.c.l.b16 %v214
    %v1355 = vunpack.c.h.b16 %v214
    %v1356 = vunpack.c.l.b16 %v215
    %v1357 = vunpack.c.h.b16 %v215
    %v1358 = vunpack.c.l.b16 %v216
    %v1359 = vunpack.c.h.b16 %v216
    %v1360 = vunpack.c.l.b16 %v217
    %v1361 = vunpack.c.h.b16 %v217
    %v1362 = vunpack.c.l.b16 %v218
    %v1363 = vunpack.c.h.b16 %v218
    %v1364 = vunpack.c.l.b16 %v219
    %v1365 = vunpack.c.h.b16 %v219
    %v1366 = vunpack.c.l.b16 %v220
    %v1367 = vunpack.c.h.b16 %v220
    %v1368 = vunpack.c.l.b16 %v221
    %v1369 = vunpack.c.h.b16 %v221
    %v1370 = vunpack.c.l.b16 %v222
    %v1371 = vunpack.c.h.b16 %v222
    %v1372 = vunpack.c.l.b16 %v223
    %v1373 = vunpack.c.h.b16 %v223
    %v1374 = vunpack.c.l.b16 %v224
    %v1375 = vunpack.c.h.b16 %v224
    %v1376 = vunpack.c.l.b16 %v225
    %v1377 = vunpack.c.h.b16 %v225
    %v1378 = vunpack.c.l.b16 %v226
    %v1379 = vunpack.c.h.b16 %v226
    %v1380 = vunpack.c.l.b16 %v227
    %v1381 = vunpack.c.h.b16 %v227
    %v1382 = vunpack.c.l.b16 %v228
    %v1383 = vunpack.c.h.b16 %v228
    %v1384 = vunpack.c.l.b16 %v229
    %v1385 = vunpack.c.h.b16 %v229
    %v1386 = vunpack.c.l.b16 %v230
    %v1387 = vunpack.c.h.b16 %v230
    %v1388 = vunpack.c.l.b16 %v231
    %v1389 = vunpack.c.h.b16 %v231
    %v1390 = vunpack.c.l.b16 %v232
    %v1391 = vunpack.c.h.b16 %v232
    %v1392 = vunpack.c.l.b16 %v233
    %v1393 = vunpack.c.h.b16 %v233
    %v1394 = vunpack.c.l.b16 %v234
    %v1395 = vunpack.c.h.b16 %v234
    %v1396 = vunpack.c.l.b16 %v235
    %v1397 = vunpack.c.h.b16 %v235
    %v1398 = vunpack.c.l.b16 %v236
    %v1399 = vunpack.c.h.b16 %v236
    %v1400 = vunpack.c.l.b16 %v237
    %v1401 = vunpack.c.h.b16 %v237
    %v1402 = vunpack.c.l.b16 %v238
    %v1403 = vunpack.c.h.b16 %v238
    %v1404 = vunpack.c.l.b16 %v239
    %v1405 = vunpack.c.h.b16 %v239
    %v1406 = vunpack.c.l.b16 %v240
    %v1407 = vunpack.c.h.b16 %v240
    %v1408 = vunpack.c.l.b16 %v241
    %v1409 = vunpack.c.h.b16 %v241
    %v1410 = vunpack.c.l.b16 %v242
    %v1411 = vunpack.c.h.b16 %v242
    %v1412 = vunpack.c.l.b16 %v243
    %v1413 = vunpack.c.h.b16 %v243
    %v1414 = vunpack.c.l.b16 %v244
    %v1415 = vunpack.c.h.b16 %v244
    %v1416 = vunpack.c.l.b16 %v245
    %v1417 = vunpack.c.h.b16 %v245
    %v1418 = vunpack.c.l.b16 %v246
    %v1419 = vunpack.c.h.b16 %v246
    %v1420 = vunpack.c.l.b16 %v247
    %v1421 = vunpack.c.h.b16 %v247
    %v1422 = vunpack.c.l.b16 %v248
    %v1423 = vunpack.c.h.b16 %v248
    %v1424 = vunpack.c.l.b16 %v249
    %v1425 = vunpack.c.h.b16 %v249
    %v1426 = vunpack.c.l.b16 %v250
    %v1427 = vunpack.c.h.b16 %v250
    %v1428 = vunpack.c.l.b16 %v251
    %v1429 = vunpack.c.h.b16 %v251
    %v1430 = vunpack.c.l.b16 %v252
    %v1431 = vunpack.c.h.b16 %v252
    %v1432 = vunpack.c.l.b16 %v253
    %v1433 = vunpack.c.h.b16 %v253
    %v1434 = vunpack.c.l.b16 %v254
    %v1435 = vunpack.c.h.b16 %v254
    %v1436 = vunpack.c.l.b16 %v255
    %v1437 = vunpack.c.h.b16 %v255
    %v1438 = vunpack.c.l.b16 %v256
    %v1439 = vunpack.c.h.b16 %v256
    %v1440 = vunpack.c.l.b16 %v257
    %v1441 = vunpack.c.h.b16 %v257
    %v1442 = vunpack.c.l.b16 %v258
    %v1443 = vunpack.c.h.b16 %v258
    %v1444 = vunpack.c.l.b16 %v259
    %v1445 = vunpack.c.h.b16 %v259
    %v1446 = vunpack.c.l.b16 %v260
    %v1447 = vunpack.c.h.b16 %v260
    %v1448 = vunpack.c.l.b16 %v261
    %v1449 = vunpack.c.h.b16 %v261
    %v1450 = vunpack.c.l.b16 %v262
    %v1451 = vunpack.c.h.b16 %v262
    %v1452 = vunpack.c.l.b16 %v263
    %v1453 = vunpack.c.h.b16 %v263
    %v1454 = vunpack.c.l.b16 %v264
    %v1455 = vunpack.c.h.b16 %v264
    %v1456 = vunpack.c.l.b16 %v265
    %v1457 = vunpack.c.h.b16 %v265
    %v1458 = vunpack.c.l.b16 %v266
    %v1459 = vunpack.c.h.b16 %v266
    %v1460 = vunpack.c.l.b16 %v267
    %v1461 = vunpack.c.h.b16 %v267
    %v1462 = vunpack.c.l.b16 %v268
    %v1463 = vunpack.c.h.b16 %v268
    %v1464 = vunpack.c.l.b16 %v269
    %v1465 = vunpack.c.h.b16 %v269
    %v1466 = vunpack.c.l.b16 %v270
    %v1467 = vunpack.c.h.b16 %v270
    %v1468 = vunpack.c.l.b16 %v271
    %v1469 = vunpack.c.h.b16 %v271
    %v1470 = vunpack.c.l.b16 %v272
    %v1471 = vunpack.c.h.b16 %v272
    %v1472 = vunpack.c.l.b16 %v273
    %v1473 = vunpack.c.h.b16 %v273
    %v1474 = vunpack.c.l.b16 %v274
    %v1475 = vunpack.c.h.b16 %v274
    %v1476 = vunpack.c.l.b16 %v275
    %v1477 = vunpack.c.h.b16 %v275
    %v1478 = vunpack.c.l.b16 %v276
    %v1479 = vunpack.c.h.b16 %v276
    %v1480 = vunpack.c.l.b16 %v277
    %v1481 = vunpack.c.h.b16 %v277
    %v1482 = vunpack.c.l.b16 %v278
    %v1483 = vunpack.c.h.b16 %v278
    %v1484 = vunpack.c.l.b16 %v279
    %v1485 = vunpack.c.h.b16 %v279
    %v1486 = vunpack.c.l.b16 %v280
    %v1487 = vunpack.c.h.b16 %v280
    %v1488 = vunpack.c.l.b16 %v281
    %v1489 = vunpack.c.h.b16 %v281
    %v1490 = vunpack.c.l.b16 %v282
    %v1491 = vunpack.c.h.b16 %v282
    %v1492 = vunpack.c.l.b16 %v283
    %v1493 = vunpack.c.h.b16 %v283
    %v1494 = vunpack.c.l.b16 %v284
    %v1495 = vunpack.c.h.b16 %v284
    %v1496 = vunpack.c.l.b16 %v285
    %v1497 = vunpack.c.h.b16 %v285
    %v1498 = vunpack.c.l.b16 %v286
    %v1499 = vunpack.c.h.b16 %v286
    %v1500 = vunpack.c.l.b16 %v287
    %v1501 = vunpack.c.h.b16 %v287
    %v1502 = vunpack.c.l.b16 %v288
    %v1503 = vunpack.c.h.b16 %v288
    %v1504 = vunpack.c.l.b16 %v289
    %v1505 = vunpack.c.h.b16 %v289
    %v1506 = vunpack.c.l.b16 %v290
    %v1507 = vunpack.c.h.b16 %v290
    %v1508 = vunpack.c.l.b16 %v291
    %v1509 = vunpack.c.h.b16 %v291
    %v1510 = vunpack.c.l.b16 %v292
    %v1511 = vunpack.c.h.b16 %v292
    %v1512 = vunpack.c.l.b16 %v293
    %v1513 = vunpack.c.h.b16 %v293
    %v1514 = vunpack.c.l.b16 %v294
    %v1515 = vunpack.c.h.b16 %v294
    %v1516 = vunpack.c.l.b16 %v295
    %v1517 = vunpack.c.h.b16 %v295
    %v1518 = vunpack.c.l.b16 %v296
    %v1519 = vunpack.c.h.b16 %v296
    %v1520 = vunpack.c.l.b16 %v297
    %v1521 = vunpack.c.h.b16 %v297
    %v1522 = vunpack.c.l.b16 %v298
    %v1523 = vunpack.c.h.b16 %v298
    %v1524 = vunpack.c.l.b16 %v299
    %v1525 = vunpack.c.h.b16 %v299
    %v1526 = vunpack.c.l.b16 %v300
    %v1527 = vunpack.c.h.b16 %v300
    %v1528 = vunpack.c.l.b16 %v301
    %v1529 = vunpack.c.h.b16 %v301
    %v1530 = vunpack.c.l.b16 %v302
    %v1531 = vunpack.c.h.b16 %v302
    %v1532 = vunpack.c.l.b16 %v303
    %v1533 = vunpack.c.h.b16 %v303
    %v1534 = vunpack.c.l.b16 %v304
    %v1535 = vunpack.c.h.b16 %v304
    %v1536 = vunpack.c.l.b16 %v305
    %v1537 = vunpack.c.h.b16 %v305
    %v1538 = vunpack.c.l.b16 %v306
    %v1539 = vunpack.c.h.b16 %v306
    %v1540 = vunpack.c.l.b16 %v307
    %v1541 = vunpack.c.h.b16 %v307
    %v1542 = vunpack.c.l.b16 %v308
    %v1543 = vunpack.c.h.b16 %v308
    %v1544 = vunpack.c.l.b16 %v309
    %v1545 = vunpack.c.h.b16 %v309
    %v1546 = vunpack.c.l.b16 %v310
    %v1547 = vunpack.c.h.b16 %v310
    %v1548 = vunpack.c.l.b16 %v311
    %v1549 = vunpack.c.h.b16 %v311
    %v1550 = vunpack.c.l.b16 %v312
    %v1551 = vunpack.c.h.b16 %v312
    %v1552 = vunpack.c.l.b16 %v313
    %v1553 = vunpack.c.h.b16 %v313
    %v1554 = vunpack.c.l.b16 %v314
    %v1555 = vunpack.c.h.b16 %v314
    %v1556 = vunpack.c.l.b16 %v315
    %v1557 = vunpack.c.h.b16 %v315
    %v1558 = vunpack.c.l.b16 %v316
    %v1559 = vunpack.c.h.b16 %v316
    %v1560 = vunpack.c.l.b16 %v317
    %v1561 = vunpack.c.h.b16 %v317
    %v1562 = vunpack.c.l.b16 %v318
    %v1563 = vunpack.c.h.b16 %v318
    %v1564 = vunpack.c.l.b16 %v319
    %v1565 = vunpack.c.h.b16 %v319
    %v1566 = vunpack.c.l.b16 %v320
    %v1567 = vunpack.c.h.b16 %v320
    %v1568 = vunpack.c.l.b16 %v321
    %v1569 = vunpack.c.h.b16 %v321
    %v1570 = vunpack.c.l.b16 %v322
    %v1571 = vunpack.c.h.b16 %v322
    %v1572 = vunpack.c.l.b16 %v323
    %v1573 = vunpack.c.h.b16 %v323
    %v1574 = vunpack.c.l.b16 %v324
    %v1575 = vunpack.c.h.b16 %v324
    %v1576 = vunpack.c.l.b16 %v325
    %v1577 = vunpack.c.h.b16 %v325
    %v1578 = vunpack.c.l.b16 %v326
    %v1579 = vunpack.c.h.b16 %v326
    %v1580 = vunpack.c.l.b16 %v327
    %v1581 = vunpack.c.h.b16 %v327
    %v1582 = vunpack.c.l.b16 %v328
    %v1583 = vunpack.c.h.b16 %v328
    %v1584 = vunpack.c.l.b16 %v329
    %v1585 = vunpack.c.h.b16 %v329
    %v1586 = vunpack.c.l.b16 %v330
    %v1587 = vunpack.c.h.b16 %v330
    %v1588 = vunpack.c.l.b16 %v331
    %v1589 = vunpack.c.h.b16 %v331
    %v1590 = vunpack.c.l.b16 %v332
    %v1591 = vunpack.c.h.b16 %v332
    %v1592 = vunpack.c.l.b16 %v333
    %v1593 = vunpack.c.h.b16 %v333
    %v1594 = vunpack.c.l.b16 %v334
    %v1595 = vunpack.c.h.b16 %v334
    %v1596 = vunpack.c.l.b16 %v335
    %v1597 = vunpack.c.h.b16 %v335
    %v1598 = vunpack.c.l.b16 %v336
    %v1599 = vunpack.c.h.b16 %v336
    %v1600 = vunpack.c.l.b16 %v337
    %v1601 = vunpack.c.h.b16 %v337
    %v1602 = vunpack.c.l.b16 %v338
    %v1603 = vunpack.c.h.b16 %v338
    %v1604 = vunpack.c.l.b16 %v339
    %v1605 = vunpack.c.h.b16 %v339
    %v1606 = vunpack.c.l.b16 %v340
    %v1607 = vunpack.c.h.b16 %v340
    %v1608 = vunpack.c.l.b16 %v341
    %v1609 = vunpack.c.h.b16 %v341
    %v1610 = vunpack.c.l.b16 %v342
    %v1611 = vunpack.c.h.b16 %v342
    %v1612 = vunpack.c.l.b16 %v343
    %v1613 = vunpack.c.h.b16 %v343
    %v1614 = vunpack.c.l.b16 %v344
    %v1615 = vunpack.c.h.b16 %v344
    %v1616 = vunpack.c.l.b16 %v345
    %v1617 = vunpack.c.h.b16 %v345
    %v1618 = vunpack.c.l.b16 %v346
    %v1619 = vunpack.c.h.b16 %v346
    %v1620 = vunpack.c.l.b16 %v347
    %v1621 = vunpack.c.h.b16 %v347
    %v1622 = vunpack.c.l.b16 %v348
    %v1623 = vunpack.c.h.b16 %v348
    %v1624 = vunpack.c.l.b16 %v349
    %v1625 = vunpack.c.h.b16 %v349
    %v1626 = vunpack.c.l.b16 %v350
    %v1627 = vunpack.c.h.b16 %v350
    %v1628 = vunpack.c.l.b16 %v351
    %v1629 = vunpack.c.h.b16 %v351
    %v1630 = vunpack.c.l.b16 %v352
    %v1631 = vunpack.c.h.b16 %v352
    %v1632 = vunpack.c.l.b16 %v353
    %v1633 = vunpack.c.h.b16 %v353
    %v1634 = vunpack.c.l.b16 %v354
    %v1635 = vunpack.c.h.b16 %v354
    %v1636 = vunpack.c.l.b16 %v355
    %v1637 = vunpack.c.h.b16 %v355
    %v1638 = vunpack.c.l.b16 %v356
    %v1639 = vunpack.c.h.b16 %v356
    %v1640 = vunpack.c.l.b16 %v357
    %v1641 = vunpack.c.h.b16 %v357
    %v1642 = vunpack.c.l.b16 %v358
    %v1643 = vunpack.c.h.b16 %v358
    %v1644 = vunpack.c.l.b16 %v359
    %v1645 = vunpack.c.h.b16 %v359
    %v1646 = vunpack.c.l.b16 %v360
    %v1647 = vunpack.c.h.b16 %v360
    %v1648 = vunpack.c.l.b16 %v361
    %v1649 = vunpack.c.h.b16 %v361
    %v1650 = vunpack.c.l.b16 %v362
    %v1651 = vunpack.c.h.b16 %v362
    %v1652 = vunpack.c.l.b16 %v363
    %v1653 = vunpack.c.h.b16 %v363
    %v1654 = vunpack.c.l.b16 %v364
    %v1655 = vunpack.c.h.b16 %v364
    %v1656 = vunpack.c.l.b16 %v365
    %v1657 = vunpack.c.h.b16 %v365
    %v1658 = vunpack.c.l.b16 %v366
    %v1659 = vunpack.c.h.b16 %v366
    %v1660 = vunpack.c.l.b16 %v367
    %v1661 = vunpack.c.h.b16 %v367
    %v1662 = vunpack.c.l.b16 %v368
    %v1663 = vunpack.c.h.b16 %v368
    %v1664 = vunpack.c.l.b16 %v369
    %v1665 = vunpack.c.h.b16 %v369
    %v1666 = vunpack.c.l.b16 %v370
    %v1667 = vunpack.c.h.b16 %v370
    %v1668 = vunpack.c.l.b16 %v371
    %v1669 = vunpack.c.h.b16 %v371
    %v1670 = vunpack.c.l.b16 %v372
    %v1671 = vunpack.c.h.b16 %v372
    %v1672 = vunpack.c.l.b16 %v373
    %v1673 = vunpack.c.h.b16 %v373
    %v1674 = vunpack.c.l.b16 %v374
    %v1675 = vunpack.c.h.b16 %v374
    %v1676 = vunpack.c.l.b16 %v375
    %v1677 = vunpack.c.h.b16 %v375
    %v1678 = vunpack.c.l.b16 %v376
    %v1679 = vunpack.c.h.b16 %v376
    %v1680 = vunpack.c.l.b16 %v377
    %v1681 = vunpack.c.h.b16 %v377
    %v1682 = vunpack.c.l.b16 %v378
    %v1683 = vunpack.c.h.b16 %v378
    %v1684 = vunpack.c.l.b16 %v379
    %v1685 = vunpack.c.h.b16 %v379
    %v1686 = vunpack.c.l.b16 %v380
    %v1687 = vunpack.c.h.b16 %v380
    %v1688 = vunpack.c.l.b16 %v381
    %v1689 = vunpack.c.h.b16 %v381
    %v1690 = vunpack.c.l.b16 %v382
    %v1691 = vunpack.c.h.b16 %v382
    %v1692 = vunpack.c.l.b16 %v383
    %v1693 = vunpack.c.h.b16 %v383
    %v1694 = vunpack.c.l.b16 %v384
    %v1695 = vunpack.c.h.b16 %v384
    %v1696 = vunpack.c.l.b16 %v385
    %v1697 = vunpack.c.h.b16 %v385
    %v1698 = vunpack.c.l.b16 %v386
    %v1699 = vunpack.c.h.b16 %v386
    %v1700 = vunpack.c.l.b16 %v387
    %v1701 = vunpack.c.h.b16 %v387
    %v1702 = vunpack.c.l.b16 %v388
    %v1703 = vunpack.c.h.b16 %v388
    %v1704 = vunpack.c.l.b16 %v389
    %v1705 = vunpack.c.h.b16 %v389
    %v1706 = vunpack.c.l.b16 %v390
    %v1707 = vunpack.c.h.b16 %v390
    %v1708 = vunpack.c.l.b16 %v391
    %v1709 = vunpack.c.h.b16 %v391
    %v1710 = vunpack.c.l.b16 %v392
    %v1711 = vunpack.c.h.b16 %v392
    %v1712 = vunpack.c.l.b16 %v393
    %v1713 = vunpack.c.h.b16 %v393
    %v1714 = vunpack.c.l.b16 %v394
    %v1715 = vunpack.c.h.b16 %v394
    %v1716 = vunpack.c.l.b16 %v395
    %v1717 = vunpack.c.h.b16 %v395
    %v1718 = vunpack.c.l.b16 %v396
    %v1719 = vunpack.c.h.b16 %v396
    %v1720 = vunpack.c.l.b16 %v397
    %v1721 = vunpack.c.h.b16 %v397
    %v1722 = vunpack.c.l.b16 %v398
    %v1723 = vunpack.c.h.b16 %v398
    %v1724 = vunpack.c.l.b16 %v399
    %v1725 = vunpack.c.h.b16 %v399
    %v1726 = vunpack.c.l.b16 %v400
    %v1727 = vunpack.c.h.b16 %v400
    %v1728 = vunpack.c.l.b16 %v401
    %v1729 = vunpack.c.h.b16 %v401
    %v1730 = vunpack.c.l.b16 %v402
    %v1731 = vunpack.c.h.b16 %v402
    %v1732 = vunpack.c.l.b16 %v403
    %v1733 = vunpack.c.h.b16 %v403
    %v1734 = vunpack.c.l.b16 %v404
    %v1735 = vunpack.c.h.b16 %v404
    %v1736 = vunpack.c.l.b16 %v405
    %v1737 = vunpack.c.h.b16 %v405
    %v1738 = vunpack.c.l.b16 %v406
    %v1739 = vunpack.c.h.b16 %v406
    %v1740 = vunpack.c.l.b16 %v407
    %v1741 = vunpack.c.h.b16 %v407
    %v1742 = vunpack.c.l.b16 %v408
    %v1743 = vunpack.c.h.b16 %v408
    %v1744 = vunpack.c.l.b16 %v409
    %v1745 = vunpack.c.h.b16 %v409
    %v1746 = vunpack.c.l.b16 %v410
    %v1747 = vunpack.c.h.b16 %v410
    %v1748 = vunpack.c.l.b16 %v411
    %v1749 = vunpack.c.h.b16 %v411
    %v1750 = vpack.c.b16 %v984, %v982
    %v1751 = vpack.c.b16 %v985, %v983
    %v1752 = vpack.c.b16 %v988, %v986
    %v1753 = vpack.c.b16 %v989, %v987
    %v1754 = vpack.c.b16 %v992, %v990
    %v1755 = vpack.c.b16 %v993, %v991
    %v1756 = vpack.c.b16 %v996, %v994
    %v1757 = vpack.c.b16 %v997, %v995
    %v1758 = vpack.c.b16 %v1000, %v998
    %v1759 = vpack.c.b16 %v1001, %v999
    %v1760 = vpack.c.b16 %v1004, %v1002
    %v1761 = vpack.c.b16 %v1005, %v1003
    %v1762 = vpack.c.b16 %v1008, %v1006
    %v1763 = vpack.c.b16 %v1009, %v1007
    %v1764 = vpack.c.b16 %v1012, %v1010
    %v1765 = vpack.c.b16 %v1013, %v1011
    %v1766 = vpack.c.b16 %v1016, %v1014
    %v1767 = vpack.c.b16 %v1017, %v1015
    %v1768 = vpack.c.b16 %v1020, %v1018
    %v1769 = vpack.c.b16 %v1021, %v1019
    %v1770 = vpack.c.b16 %v1024, %v1022
    %v1771 = vpack.c.b16 %v1025, %v1023
    %v1772 = vpack.c.b16 %v1028, %v1026
    %v1773 = vpack.c.b16 %v1029, %v1027
    %v1774 = vpack.c.b16 %v1032, %v1030
    %v1775 = vpack.c.b16 %v1033, %v1031
    %v1776 = vpack.c.b16 %v1036, %v1034
    %v1777 = vpack.c.b16 %v1037, %v1035
    %v1778 = vpack.c.b16 %v1040, %v1038
    %v1779 = vpack.c.b16 %v1041, %v1039
    %v1780 = vpack.c.b16 %v1044, %v1042
    %v1781 = vpack.c.b16 %v1045, %v1043
    %v1782 = vpack.c.b16 %v1048, %v1046
    %v1783 = vpack.c.b16 %v1049, %v1047
    %v1784 = vpack.c.b16 %v1052, %v1050
    %v1785 = vpack.c.b16 %v1053, %v1051
    %v1786 = vpack.c.b16 %v1056, %v1054
    %v1787 = vpack.c.b16 %v1057, %v1055
    %v1788 = vpack.c.b16 %v1060, %v1058
    %v1789 = vpack.c.b16 %v1061, %v1059
    %v1790 = vpack.c.b16 %v1064, %v1062
    %v1791 = vpack.c.b16 %v1065, %v1063
    %v1792 = vpack.c.b16 %v1068, %v1066
    %v1793 = vpack.c.b16 %v1069, %v1067
    %v1794 = vpack.c.b16 %v1072, %v1070
    %v1795 = vpack.c.b16 %v1073, %v1071
    %v1796 = vpack.c.b16 %v1076, %v1074
    %v1797 = vpack.c.b16 %v1077, %v1075
    %v1798 = vpack.c.b16 %v1080, %v1078
    %v1799 = vpack.c.b16 %v1081, %v1079
    %v1800 = vpack.c.b16 %v1084, %v1082
    %v1801 = vpack.c.b16 %v1085, %v1083
    %v1802 = vpack.c.b16 %v1088, %v1086
    %v1803 = vpack.c.b16 %v1089, %v1087
    %v1804 = vpack.c.b16 %v1092, %v1090
    %v1805 = vpack.c.b16 %v1093, %v1091
    %v1806 = vpack.c.b16 %v1096, %v1094
    %v1807 = vpack.c.b16 %v1097, %v1095
    %v1808 = vpack.c.b16 %v1100, %v1098
    %v1809 = vpack.c.b16 %v1101, %v1099
    %v1810 = vpack.c.b16 %v1104, %v1102
    %v1811 = vpack.c.b16 %v1105, %v1103
    %v1812 = vpack.c.b16 %v1108, %v1106
    %v1813 = vpack.c.b16 %v1109, %v1107
    %v1814 = vpack.c.b16 %v1112, %v1110
    %v1815 = vpack.c.b16 %v1113, %v1111
    %v1816 = vpack.c.b16 %v1116, %v1114
    %v1817 = vpack.c.b16 %v1117, %v1115
    %v1818 = vpack.c.b16 %v1120, %v1118
    %v1819 = vpack.c.b16 %v1121, %v1119
    %v1820 = vpack.c.b16 %v1124, %v1122
    %v1821 = vpack.c.b16 %v1125, %v1123
    %v1822 = vpack.c.b16 %v1128, %v1126
    %v1823 = vpack.c.b16 %v1129, %v1127
    %v1824 = vpack.c.b16 %v1132, %v1130
    %v1825 = vpack.c.b16 %v1133, %v1131
    %v1826 = vpack.c.b16 %v1136, %v1134
    %v1827 = vpack.c.b16 %v1137, %v1135
    %v1828 = vpack.c.b16 %v1140, %v1138
    %v1829 = vpack.c.b16 %v1141, %v1139
    %v1830 = vpack.c.b16 %v1144, %v1142
    %v1831 = vpack.c.b16 %v1145, %v1143
    %v1832 = vpack.c.b16 %v1148, %v1146
    %v1833 = vpack.c.b16 %v1149, %v1147
    %v1834 = vpack.c.b16 %v1152, %v1150
    %v1835 = vpack.c.b16 %v1153, %v1151
    %v1836 = vpack.c.b16 %v1156, %v1154
    %v1837 = vpack.c.b16 %v1157, %v1155
    %v1838 = vpack.c.b16 %v1160, %v1158
    %v1839 = vpack.c.b16 %v1161, %v1159
    %v1840 = vpack.c.b16 %v1164, %v1162
    %v1841 = vpack.c.b16 %v1165, %v1163
    %v1842 = vpack.c.b16 %v1168, %v1166
    %v1843 = vpack.c.b16 %v1169, %v1167
    %v1844 = vpack.c.b16 %v1172, %v1170
    %v1845 = vpack.c.b16 %v1173, %v1171
    %v1846 = vpack.c.b16 %v1176, %v1174
    %v1847 = vpack.c.b16 %v1177, %v1175
    %v1848 = vpack.c.b16 %v1180, %v1178
    %v1849 = vpack.c.b16 %v1181, %v1179
    %v1850 = vpack.c.b16 %v1184, %v1182
    %v1851 = vpack.c.b16 %v1185, %v1183
    %v1852 = vpack.c.b16 %v1188, %v1186
    %v1853 = vpack.c.b16 %v1189, %v1187
    %v1854 = vpack.c.b16 %v1192, %v1190
    %v1855 = vpack.c.b16 %v1193, %v1191
    %v1856 = vpack.c.b16 %v1196, %v1194
    %v1857 = vpack.c.b16 %v1197, %v1195
    %v1858 = vpack.c.b16 %v1200, %v1198
    %v1859 = vpack.c.b16 %v1201, %v1199
    %v1860 = vpack.c.b16 %v1204, %v1202
    %v1861 = vpack.c.b16 %v1205, %v1203
    %v1862 = vpack.c.b16 %v1208, %v1206
    %v1863 = vpack.c.b16 %v1209, %v1207
    %v1864 = vpack.c.b16 %v1212, %v1210
    %v1865 = vpack.c.b16 %v1213, %v1211
    %v1866 = vpack.c.b16 %v1216, %v1214
    %v1867 = vpack.c.b16 %v1217, %v1215
    %v1868 = vpack.c.b16 %v1220, %v1218
    %v1869 = vpack.c.b16 %v1221, %v1219
    %v1870 = vpack.c.b16 %v1224, %v1222
    %v1871 = vpack.c.b16 %v1225, %v1223
    %v1872 = vpack.c.b16 %v1228, %v1226
    %v1873 = vpack.c.b16 %v1229, %v1227
    %v1874 = vpack.c.b16 %v1232, %v1230
    %v1875 = vpack.c.b16 %v1233, %v1231
    %v1876 = vpack.c.b16 %v1236, %v1234
    %v1877 = vpack.c.b16 %v1237, %v1235
    %v1878 = vpack.c.b16 %v1240, %v1238
    %v1879 = vpack.c.b16 %v1241, %v1239
    %v1880 = vpack.c.b16 %v1244, %v1242
    %v1881 = vpack.c.b16 %v1245, %v1243
    %v1882 = vpack.c.b16 %v1248, %v1246
    %v1883 = vpack.c.b16 %v1249, %v1247
    %v1884 = vpack.c.b16 %v1252, %v1250
    %v1885 = vpack.c.b16 %v1253, %v1251
    %v1886 = vpack.c.b16 %v1256, %v1254
    %v1887 = vpack.c.b16 %v1257, %v1255
    %v1888 = vpack.c.b16 %v1260, %v1258
    %v1889 = vpack.c.b16 %v1261, %v1259
    %v1890 = vpack.c.b16 %v1264, %v1262
    %v1891 = vpack.c.b16 %v1265, %v1263
    %v1892 = vpack.c.b16 %v1268, %v1266
    %v1893 = vpack.c.b16 %v1269, %v1267
    %v1894 = vpack.c.b16 %v1272, %v1270
    %v1895 = vpack.c.b16 %v1273, %v1271
    %v1896 = vpack.c.b16 %v1276, %v1274
    %v1897 = vpack.c.b16 %v1277, %v1275
    %v1898 = vpack.c.b16 %v1280, %v1278
    %v1899 = vpack.c.b16 %v1281, %v1279
    %v1900 = vpack.c.b16 %v1284, %v1282
    %v1901 = vpack.c.b16 %v1285, %v1283
    %v1902 = vpack.c.b16 %v1288, %v1286
    %v1903 = vpack.c.b16 %v1289, %v1287
    %v1904 = vpack.c.b16 %v1292, %v1290
    %v1905 = vpack.c.b16 %v1293, %v1291
    %v1906 = vpack.c.b16 %v1296, %v1294
    %v1907 = vpack.c.b16 %v1297, %v1295
    %v1908 = vpack.c.b16 %v1300, %v1298
    %v1909 = vpack.c.b16 %v1301, %v1299
    %v1910 = vpack.c.b16 %v1304, %v1302
    %v1911 = vpack.c.b16 %v1305, %v1303
    %v1912 = vpack.c.b16 %v1308, %v1306
    %v1913 = vpack.c.b16 %v1309, %v1307
    %v1914 = vpack.c.b16 %v1312, %v1310
    %v1915 = vpack.c.b16 %v1313, %v1311
    %v1916 = vpack.c.b16 %v1316, %v1314
    %v1917 = vpack.c.b16 %v1317, %v1315
    %v1918 = vpack.c.b16 %v1320, %v1318
    %v1919 = vpack.c.b16 %v1321, %v1319
    %v1920 = vpack.c.b16 %v1324, %v1322
    %v1921 = vpack.c.b16 %v1325, %v1323
    %v1922 = vpack.c.b16 %v1328, %v1326
    %v1923 = vpack.c.b16 %v1329, %v1327
    %v1924 = vpack.c.b16 %v1332, %v1330
    %v1925 = vpack.c.b16 %v1333, %v1331
    %v1926 = vpack.c.b16 %v1336, %v1334
    %v1927 = vpack.c.b16 %v1337, %v1335
    %v1928 = vpack.c.b16 %v1340, %v1338
    %v1929 = vpack.c.b16 %v1341, %v1339
    %v1930 = vpack.c.b16 %v1344, %v1342
    %v1931 = vpack.c.b16 %v1345, %v1343
    %v1932 = vpack.c.b16 %v1348, %v1346
    %v1933 = vpack.c.b16 %v1349, %v1347
    %v1934 = vpack.c.b16 %v1352, %v1350
    %v1935 = vpack.c.b16 %v1353, %v1351
    %v1936 = vpack.c.b16 %v1356, %v1354
    %v1937 = vpack.c.b16 %v1357, %v1355
    %v1938 = vpack.c.b16 %v1360, %v1358
    %v1939 = vpack.c.b16 %v1361, %v1359
    %v1940 = vpack.c.b16 %v1364, %v1362
    %v1941 = vpack.c.b16 %v1365, %v1363
    %v1942 = vpack.c.b16 %v1368, %v1366
    %v1943 = vpack.c.b16 %v1369, %v1367
    %v1944 = vpack.c.b16 %v1372, %v1370
    %v1945 = vpack.c.b16 %v1373, %v1371
    %v1946 = vpack.c.b16 %v1376, %v1374
    %v1947 = vpack.c.b16 %v1377, %v1375
    %v1948 = vpack.c.b16 %v1380, %v1378
    %v1949 = vpack.c.b16 %v1381, %v1379
    %v1950 = vpack.c.b16 %v1384, %v1382
    %v1951 = vpack.c.b16 %v1385, %v1383
    %v1952 = vpack.c.b16 %v1388, %v1386
    %v1953 = vpack.c.b16 %v1389, %v1387
    %v1954 = vpack.c.b16 %v1392, %v1390
    %v1955 = vpack.c.b16 %v1393, %v1391
    %v1956 = vpack.c.b16 %v1396, %v1394
    %v1957 = vpack.c.b16 %v1397, %v1395
    %v1958 = vpack.c.b16 %v1400, %v1398
    %v1959 = vpack.c.b16 %v1401, %v1399
    %v1960 = vpack.c.b16 %v1404, %v1402
    %v1961 = vpack.c.b16 %v1405, %v1403
    %v1962 = vpack.c.b16 %v1408, %v1406
    %v1963 = vpack.c.b16 %v1409, %v1407
    %v1964 = vpack.c.b16 %v1412, %v1410
    %v1965 = vpack.c.b16 %v1413, %v1411
    %v1966 = vpack.c.b16 %v1416, %v1414
    %v1967 = vpack.c.b16 %v1417, %v1415
    %v1968 = vpack.c.b16 %v1420, %v1418
    %v1969 = vpack.c.b16 %v1421, %v1419
    %v1970 = vpack.c.b16 %v1424, %v1422
    %v1971 = vpack.c.b16 %v1425, %v1423
    %v1972 = vpack.c.b16 %v1428, %v1426
    %v1973 = vpack.c.b16 %v1429, %v1427
    %v1974 = vpack.c.b16 %v1432, %v1430
    %v1975 = vpack.c.b16 %v1433, %v1431
    %v1976 = vpack.c.b16 %v1436, %v1434
    %v1977 = vpack.c.b16 %v1437, %v1435
    %v1978 = vpack.c.b16 %v1440, %v1438
    %v1979 = vpack.c.b16 %v1441, %v1439
    %v1980 = vpack.c.b16 %v1444, %v1442
    %v1981 = vpack.c.b16 %v1445, %v1443
    %v1982 = vpack.c.b16 %v1448, %v1446
    %v1983 = vpack.c.b16 %v1449, %v1447
    %v1984 = vpack.c.b16 %v1452, %v1450
    %v1985 = vpack.c.b16 %v1453, %v1451
    %v1986 = vpack.c.b16 %v1456, %v1454
    %v1987 = vpack.c.b16 %v1457, %v1455
    %v1988 = vpack.c.b16 %v1460, %v1458
    %v1989 = vpack.c.b16 %v1461, %v1459
    %v1990 = vpack.c.b16 %v1464, %v1462
    %v1991 = vpack.c.b16 %v1465, %v1463
    %v1992 = vpack.c.b16 %v1468, %v1466
    %v1993 = vpack.c.b16 %v1469, %v1467
    %v1994 = vpack.c.b16 %v1472, %v1470
    %v1995 = vpack.c.b16 %v1473, %v1471
    %v1996 = vpack.c.b16 %v1476, %v1474
    %v1997 = vpack.c.b16 %v1477, %v1475
    %v1998 = vpack.c.b16 %v1480, %v1478
    %v1999 = vpack.c.b16 %v1481, %v1479
    %v2000 = vpack.c.b16 %v1484, %v1482
    %v2001 = vpack.c.b16 %v1485, %v1483
    %v2002 = vpack.c.b16 %v1488, %v1486
    %v2003 = vpack.c.b16 %v1489, %v1487
    %v2004 = vpack.c.b16 %v1492, %v1490
    %v2005 = vpack.c.b16 %v1493, %v1491
    %v2006 = vpack.c.b16 %v1496, %v1494
    %v2007 = vpack.c.b16 %v1497, %v1495
    %v2008 = vpack.c.b16 %v1500, %v1498
    %v2009 = vpack.c.b16 %v1501, %v1499
    %v2010 = vpack.c.b16 %v1504, %v1502
    %v2011 = vpack.c.b16 %v1505, %v1503
    %v2012 = vpack.c.b16 %v1508, %v1506
    %v2013 = vpack.c.b16 %v1509, %v1507
    %v2014 = vpack.c.b16 %v1512, %v1510
    %v2015 = vpack.c.b16 %v1513, %v1511
    %v2016 = vpack.c.b16 %v1516, %v1514
    %v2017 = vpack.c.b16 %v1517, %v1515
    %v2018 = vpack.c.b16 %v1520, %v1518
    %v2019 = vpack.c.b16 %v1521, %v1519
    %v2020 = vpack.c.b16 %v1524, %v1522
    %v2021 = vpack.c.b16 %v1525, %v1523
    %v2022 = vpack.c.b16 %v1528, %v1526
    %v2023 = vpack.c.b16 %v1529, %v1527
    %v2024 = vpack.c.b16 %v1532, %v1530
    %v2025 = vpack.c.b16 %v1533, %v1531
    %v2026 = vpack.c.b16 %v1536, %v1534
    %v2027 = vpack.c.b16 %v1537, %v1535
    %v2028 = vpack.c.b16 %v1540, %v1538
    %v2029 = vpack.c.b16 %v1541, %v1539
    %v2030 = vpack.c.b16 %v1544, %v1542
    %v2031 = vpack.c.b16 %v1545, %v1543
    %v2032 = vpack.c.b16 %v1548, %v1546
    %v2033 = vpack.c.b16 %v1549, %v1547
    %v2034 = vpack.c.b16 %v1552, %v1550
    %v2035 = vpack.c.b16 %v1553, %v1551
    %v2036 = vpack.c.b16 %v1556, %v1554
    %v2037 = vpack.c.b16 %v1557, %v1555
    %v2038 = vpack.c.b16 %v1560, %v1558
    %v2039 = vpack.c.b16 %v1561, %v1559
    %v2040 = vpack.c.b16 %v1564, %v1562
    %v2041 = vpack.c.b16 %v1565, %v1563
    %v2042 = vpack.c.b16 %v1568, %v1566
    %v2043 = vpack.c.b16 %v1569, %v1567
    %v2044 = vpack.c.b16 %v1572, %v1570
    %v2045 = vpack.c.b16 %v1573, %v1571
    %v2046 = vpack.c.b16 %v1576, %v1574
    %v2047 = vpack.c.b16 %v1577, %v1575
    %v2048 = vpack.c.b16 %v1580, %v1578
    %v2049 = vpack.c.b16 %v1581, %v1579
    %v2050 = vpack.c.b16 %v1584, %v1582
    %v2051 = vpack.c.b16 %v1585, %v1583
    %v2052 = vpack.c.b16 %v1588, %v1586
    %v2053 = vpack.c.b16 %v1589, %v1587
    %v2054 = vpack.c.b16 %v1592, %v1590
    %v2055 = vpack.c.b16 %v1593, %v1591
    %v2056 = vpack.c.b16 %v1596, %v1594
    %v2057 = vpack.c.b16 %v1597, %v1595
    %v2058 = vpack.c.b16 %v1600, %v1598
    %v2059 = vpack.c.b16 %v1601, %v1599
    %v2060 = vpack.c.b16 %v1604, %v1602
    %v2061 = vpack.c.b16 %v1605, %v1603
    %v2062 = vpack.c.b16 %v1608, %v1606
    %v2063 = vpack.c.b16 %v1609, %v1607
    %v2064 = vpack.c.b16 %v1612, %v1610
    %v2065 = vpack.c.b16 %v1613, %v1611
    %v2066 = vpack.c.b16 %v1616, %v1614
    %v2067 = vpack.c.b16 %v1617, %v1615
    %v2068 = vpack.c.b16 %v1620, %v1618
    %v2069 = vpack.c.b16 %v1621, %v1619
    %v2070 = vpack.c.b16 %v1624, %v1622
    %v2071 = vpack.c.b16 %v1625, %v1623
    %v2072 = vpack.c.b16 %v1628, %v1626
    %v2073 = vpack.c.b16 %v1629, %v1627
    %v2074 = vpack.c.b16 %v1632, %v1630
    %v2075 = vpack.c.b16 %v1633, %v1631
    %v2076 = vpack.c.b16 %v1636, %v1634
    %v2077 = vpack.c.b16 %v1637, %v1635
    %v2078 = vpack.c.b16 %v1640, %v1638
    %v2079 = vpack.c.b16 %v1641, %v1639
    %v2080 = vpack.c.b16 %v1644, %v1642
    %v2081 = vpack.c.b16 %v1645, %v1643
    %v2082 = vpack.c.b16 %v1648, %v1646
    %v2083 = vpack.c.b16 %v1649, %v1647
    %v2084 = vpack.c.b16 %v1652, %v1650
    %v2085 = vpack.c.b16 %v1653, %v1651
    %v2086 = vpack.c.b16 %v1656, %v1654
    %v2087 = vpack.c.b16 %v1657, %v1655
    %v2088 = vpack.c.b16 %v1660, %v1658
    %v2089 = vpack.c.b16 %v1661, %v1659
    %v2090 = vpack.c.b16 %v1664, %v1662
    %v2091 = vpack.c.b16 %v1665, %v1663
    %v2092 = vpack.c.b16 %v1668, %v1666
    %v2093 = vpack.c.b16 %v1669, %v1667
    %v2094 = vpack.c.b16 %v1672, %v1670
    %v2095 = vpack.c.b16 %v1673, %v1671
    %v2096 = vpack.c.b16 %v1676, %v1674
    %v2097 = vpack.c.b16 %v1677, %v1675
    %v2098 = vpack.c.b16 %v1680, %v1678
    %v2099 = vpack.c.b16 %v1681, %v1679
    %v2100 = vpack.c.b16 %v1684, %v1682
    %v2101 = vpack.c.b16 %v1685, %v1683
    %v2102 = vpack.c.b16 %v1688, %v1686
    %v2103 = vpack.c.b16 %v1689, %v1687
    %v2104 = vpack.c.b16 %v1692, %v1690
    %v2105 = vpack.c.b16 %v1693, %v1691
    %v2106 = vpack.c.b16 %v1696, %v1694
    %v2107 = vpack.c.b16 %v1697, %v1695
    %v2108 = vpack.c.b16 %v1700, %v1698
    %v2109 = vpack.c.b16 %v1701, %v1699
    %v2110 = vpack.c.b16 %v1704, %v1702
    %v2111 = vpack.c.b16 %v1705, %v1703
    %v2112 = vpack.c.b16 %v1708, %v1706
    %v2113 = vpack.c.b16 %v1709, %v1707
    %v2114 = vpack.c.b16 %v1712, %v1710
    %v2115 = vpack.c.b16 %v1713, %v1711
    %v2116 = vpack.c.b16 %v1716, %v1714
    %v2117 = vpack.c.b16 %v1717, %v1715
    %v2118 = vpack.c.b16 %v1720, %v1718
    %v2119 = vpack.c.b16 %v1721, %v1719
    %v2120 = vpack.c.b16 %v1724, %v1722
    %v2121 = vpack.c.b16 %v1725, %v1723
    %v2122 = vpack.c.b16 %v1728, %v1726
    %v2123 = vpack.c.b16 %v1729, %v1727
    %v2124 = vpack.c.b16 %v1732, %v1730
    %v2125 = vpack.c.b16 %v1733, %v1731
    %v2126 = vpack.c.b16 %v1736, %v1734
    %v2127 = vpack.c.b16 %v1737, %v1735
    %v2128 = vpack.c.b16 %v1740, %v1738
    %v2129 = vpack.c.b16 %v1741, %v1739
    %v2130 = vpack.c.b16 %v1744, %v1742
    %v2131 = vpack.c.b16 %v1745, %v1743
    %v2132 = vpack.c.b16 %v1748, %v1746
    %v2133 = vpack.c.b16 %v1749, %v1747
    %2518 = vmatprep.subr.bf16.mxu0 %v1751
    %2519 = vmatpush1.bf16.msra.mxu0 %v1750
    %2520 = vmatprep.subr.bf16.mxu0 %v1753
    %2521 = vmatpush1.bf16.msra.mxu0 %v1752
    %2522 = vmatprep.subr.bf16.mxu0 %v1755
    %2523 = vmatpush1.bf16.msra.mxu0 %v1754
    %2524 = vmatprep.subr.bf16.mxu0 %v1757
    %2525 = vmatpush1.bf16.msra.mxu0 %v1756
    %2526 = vmatprep.subr.bf16.mxu0 %v1759
    %2527 = vmatpush1.bf16.msra.mxu0 %v1758
    %2528 = vmatprep.subr.bf16.mxu0 %v1761
    %2529 = vmatpush1.bf16.msra.mxu0 %v1760
    %2530 = vmatprep.subr.bf16.mxu0 %v1763
    %2531 = vmatpush1.bf16.msra.mxu0 %v1762
    %2532 = vmatprep.subr.bf16.mxu0 %v1765
    %2533 = vmatpush1.bf16.msra.mxu0 %v1764
    %2534 = vmatprep.subr.bf16.mxu0 %v1767
    %2535 = vmatpush1.bf16.msra.mxu0 %v1766
    %2536 = vmatprep.subr.bf16.mxu0 %v1769
    %2537 = vmatpush1.bf16.msra.mxu0 %v1768
    %2538 = vmatprep.subr.bf16.mxu0 %v1771
    %2539 = vmatpush1.bf16.msra.mxu0 %v1770
    %2540 = vmatprep.subr.bf16.mxu0 %v1773
    %2541 = vmatpush1.bf16.msra.mxu0 %v1772
    %2542 = vmatprep.subr.bf16.mxu0 %v1775
    %2543 = vmatpush1.bf16.msra.mxu0 %v1774
    %2544 = vmatprep.subr.bf16.mxu0 %v1777
    %2545 = vmatpush1.bf16.msra.mxu0 %v1776
    %2546 = vmatprep.subr.bf16.mxu0 %v1779
    %2547 = vmatpush1.bf16.msra.mxu0 %v1778
    %2548 = vmatprep.subr.bf16.mxu0 %v1781
    %2549 = vmatpush1.bf16.msra.mxu0 %v1780
    %2550 = vmatprep.mubr.bf16.mxu0 %v464
    %2551 = vmatmul.mubr.bf16.gmra.mrb[0].mxu0 %v450
    %v2552 = vpop.f32.mrb[0].mxu0
    %v2553 = vadd.f32 %v417, %v2552
    %v2554 = vpop.f32.mrb[0].mxu0
    %v2555 = vadd.f32 %v421, %v2554
    %v2556 = vpop.f32.mrb[0].mxu0
    %v2557 = vpop.f32.mrb[0].mxu0
    %2558 = vdwg.mxu0
    %2559 = vmatprep.subr.bf16.mxu0 %v1783
    %2560 = vmatpush1.bf16.msra.mxu0 %v1782
    %2561 = vmatprep.subr.bf16.mxu0 %v1785
    %2562 = vmatpush1.bf16.msra.mxu0 %v1784
    %2563 = vmatprep.subr.bf16.mxu0 %v1787
    %2564 = vmatpush1.bf16.msra.mxu0 %v1786
    %2565 = vmatprep.subr.bf16.mxu0 %v1789
    %2566 = vmatpush1.bf16.msra.mxu0 %v1788
    %2567 = vmatprep.subr.bf16.mxu0 %v1791
    %2568 = vmatpush1.bf16.msra.mxu0 %v1790
    %2569 = vmatprep.subr.bf16.mxu0 %v1793
    %2570 = vmatpush1.bf16.msra.mxu0 %v1792
    %2571 = vmatprep.subr.bf16.mxu0 %v1795
    %2572 = vmatpush1.bf16.msra.mxu0 %v1794
    %2573 = vmatprep.subr.bf16.mxu0 %v1797
    %2574 = vmatpush1.bf16.msra.mxu0 %v1796
    %2575 = vmatprep.subr.bf16.mxu0 %v1799
    %2576 = vmatpush1.bf16.msra.mxu0 %v1798
    %2577 = vmatprep.subr.bf16.mxu0 %v1801
    %2578 = vmatpush1.bf16.msra.mxu0 %v1800
    %2579 = vmatprep.subr.bf16.mxu0 %v1803
    %2580 = vmatpush1.bf16.msra.mxu0 %v1802
    %2581 = vmatprep.subr.bf16.mxu0 %v1805
    %2582 = vmatpush1.bf16.msra.mxu0 %v1804
    %2583 = vmatprep.subr.bf16.mxu0 %v1807
    %2584 = vmatpush1.bf16.msra.mxu0 %v1806
    %2585 = vmatprep.subr.bf16.mxu0 %v1809
    %2586 = vmatpush1.bf16.msra.mxu0 %v1808
    %2587 = vmatprep.subr.bf16.mxu0 %v1811
    %2588 = vmatpush1.bf16.msra.mxu0 %v1810
    %2589 = vmatprep.subr.bf16.mxu0 %v1813
    %2590 = vmatpush1.bf16.msra.mxu0 %v1812
    %2591 = vmatprep.mubr.bf16.mxu0 %v474
    %2592 = vmatmul.mubr.bf16.gmra.mrb[0].mxu0 %v472
    %v2593 = vpop.f32.mrb[0].mxu0
    %v2594 = vadd.f32 %v2553, %v2593
    %v2595 = vpop.f32.mrb[0].mxu0
    %v2596 = vadd.f32 %v2555, %v2595
    %v2597 = vpop.f32.mrb[0].mxu0
    %v2598 = vpop.f32.mrb[0].mxu0
    %2599 = vdwg.mxu0
    %2600 = vmatprep.subr.bf16.mxu0 %v1815
    %2601 = vmatpush1.bf16.msra.mxu0 %v1814
    %2602 = vmatprep.subr.bf16.mxu0 %v1817
    %2603 = vmatpush1.bf16.msra.mxu0 %v1816
    %2604 = vmatprep.subr.bf16.mxu0 %v1819
    %2605 = vmatpush1.bf16.msra.mxu0 %v1818
    %2606 = vmatprep.subr.bf16.mxu0 %v1821
    %2607 = vmatpush1.bf16.msra.mxu0 %v1820
    %2608 = vmatprep.subr.bf16.mxu0 %v1823
    %2609 = vmatpush1.bf16.msra.mxu0 %v1822
    %2610 = vmatprep.subr.bf16.mxu0 %v1825
    %2611 = vmatpush1.bf16.msra.mxu0 %v1824
    %2612 = vmatprep.subr.bf16.mxu0 %v1827
    %2613 = vmatpush1.bf16.msra.mxu0 %v1826
    %2614 = vmatprep.subr.bf16.mxu0 %v1829
    %2615 = vmatpush1.bf16.msra.mxu0 %v1828
    %2616 = vmatprep.subr.bf16.mxu0 %v1831
    %2617 = vmatpush1.bf16.msra.mxu0 %v1830
    %2618 = vmatprep.subr.bf16.mxu0 %v1833
    %2619 = vmatpush1.bf16.msra.mxu0 %v1832
    %2620 = vmatprep.subr.bf16.mxu0 %v1835
    %2621 = vmatpush1.bf16.msra.mxu0 %v1834
    %2622 = vmatprep.subr.bf16.mxu0 %v1837
    %2623 = vmatpush1.bf16.msra.mxu0 %v1836
    %2624 = vmatprep.subr.bf16.mxu0 %v1839
    %2625 = vmatpush1.bf16.msra.mxu0 %v1838
    %2626 = vmatprep.subr.bf16.mxu0 %v1841
    %2627 = vmatpush1.bf16.msra.mxu0 %v1840
    %2628 = vmatprep.subr.bf16.mxu0 %v1843
    %2629 = vmatpush1.bf16.msra.mxu0 %v1842
    %2630 = vmatprep.subr.bf16.mxu0 %v1845
    %2631 = vmatpush1.bf16.msra.mxu0 %v1844
    %2632 = vmatprep.mubr.bf16.mxu0 %v471
    %2633 = vmatmul.mubr.bf16.gmra.mrb[0].mxu0 %v457
    %v2634 = vpop.f32.mrb[0].mxu0
    %v2635 = vadd.f32 %v2594, %v2634
    %v2636 = vpop.f32.mrb[0].mxu0
    %v2637 = vadd.f32 %v2596, %v2636
    %v2638 = vpop.f32.mrb[0].mxu0
    %v2639 = vpop.f32.mrb[0].mxu0
    %2640 = vdwg.mxu0
    %2641 = vmatprep.subr.bf16.mxu0 %v1847
    %2642 = vmatpush1.bf16.msra.mxu0 %v1846
    %2643 = vmatprep.subr.bf16.mxu0 %v1849
    %2644 = vmatpush1.bf16.msra.mxu0 %v1848
    %2645 = vmatprep.subr.bf16.mxu0 %v1851
    %2646 = vmatpush1.bf16.msra.mxu0 %v1850
    %2647 = vmatprep.subr.bf16.mxu0 %v1853
    %2648 = vmatpush1.bf16.msra.mxu0 %v1852
    %2649 = vmatprep.subr.bf16.mxu0 %v1855
    %2650 = vmatpush1.bf16.msra.mxu0 %v1854
    %2651 = vmatprep.subr.bf16.mxu0 %v1857
    %2652 = vmatpush1.bf16.msra.mxu0 %v1856
    %2653 = vmatprep.subr.bf16.mxu0 %v1859
    %2654 = vmatpush1.bf16.msra.mxu0 %v1858
    %2655 = vmatprep.subr.bf16.mxu0 %v1861
    %2656 = vmatpush1.bf16.msra.mxu0 %v1860
    %2657 = vmatprep.subr.bf16.mxu0 %v1863
    %2658 = vmatpush1.bf16.msra.mxu0 %v1862
    %2659 = vmatprep.subr.bf16.mxu0 %v1865
    %2660 = vmatpush1.bf16.msra.mxu0 %v1864
    %2661 = vmatprep.subr.bf16.mxu0 %v1867
    %2662 = vmatpush1.bf16.msra.mxu0 %v1866
    %2663 = vmatprep.subr.bf16.mxu0 %v1869
    %2664 = vmatpush1.bf16.msra.mxu0 %v1868
    %2665 = vmatprep.subr.bf16.mxu0 %v1871
    %2666 = vmatpush1.bf16.msra.mxu0 %v1870
    %2667 = vmatprep.subr.bf16.mxu0 %v1873
    %2668 = vmatpush1.bf16.msra.mxu0 %v1872
    %2669 = vmatprep.subr.bf16.mxu0 %v1875
    %2670 = vmatpush1.bf16.msra.mxu0 %v1874
    %2671 = vmatprep.subr.bf16.mxu0 %v1877
    %2672 = vmatpush1.bf16.msra.mxu0 %v1876
    %2673 = vmatprep.mubr.bf16.mxu0 %v475
    %2674 = vmatmul.mubr.bf16.gmra.mrb[0].mxu0 %v473
    %v2675 = vpop.f32.mrb[0].mxu0
    %v2676 = vadd.f32 %v2635, %v2675
    %v2677 = vpop.f32.mrb[0].mxu0
    %v2678 = vadd.f32 %v2637, %v2677
    %v2679 = vpop.f32.mrb[0].mxu0
    %v2680 = vpop.f32.mrb[0].mxu0
    %2681 = vdwg.mxu0
    %2682 = vmatprep.subr.bf16.mxu0 %v1879
    %2683 = vmatpush1.bf16.msra.mxu0 %v1878
    %2684 = vmatprep.subr.bf16.mxu0 %v1881
    %2685 = vmatpush1.bf16.msra.mxu0 %v1880
    %2686 = vmatprep.subr.bf16.mxu0 %v1883
    %2687 = vmatpush1.bf16.msra.mxu0 %v1882
    %2688 = vmatprep.subr.bf16.mxu0 %v1885
    %2689 = vmatpush1.bf16.msra.mxu0 %v1884
    %2690 = vmatprep.subr.bf16.mxu0 %v1887
    %2691 = vmatpush1.bf16.msra.mxu0 %v1886
    %2692 = vmatprep.subr.bf16.mxu0 %v1889
    %2693 = vmatpush1.bf16.msra.mxu0 %v1888
    %2694 = vmatprep.subr.bf16.mxu0 %v1891
    %2695 = vmatpush1.bf16.msra.mxu0 %v1890
    %2696 = vmatprep.subr.bf16.mxu0 %v1893
    %2697 = vmatpush1.bf16.msra.mxu0 %v1892
    %2698 = vmatprep.subr.bf16.mxu0 %v1895
    %2699 = vmatpush1.bf16.msra.mxu0 %v1894
    %2700 = vmatprep.subr.bf16.mxu0 %v1897
    %2701 = vmatpush1.bf16.msra.mxu0 %v1896
    %2702 = vmatprep.subr.bf16.mxu0 %v1899
    %2703 = vmatpush1.bf16.msra.mxu0 %v1898
    %2704 = vmatprep.subr.bf16.mxu0 %v1901
    %2705 = vmatpush1.bf16.msra.mxu0 %v1900
    %2706 = vmatprep.subr.bf16.mxu0 %v1903
    %2707 = vmatpush1.bf16.msra.mxu0 %v1902
    %2708 = vmatprep.subr.bf16.mxu0 %v1905
    %2709 = vmatpush1.bf16.msra.mxu0 %v1904
    %2710 = vmatprep.subr.bf16.mxu0 %v1907
    %2711 = vmatpush1.bf16.msra.mxu0 %v1906
    %2712 = vmatprep.subr.bf16.mxu0 %v1909
    %2713 = vmatpush1.bf16.msra.mxu0 %v1908
    %2714 = vmatprep.mubr.bf16.mxu0 %v513
    %2715 = vmatmul.mubr.bf16.gmra.mrb[0].mxu0 %v499
    %v2716 = vpop.f32.mrb[0].mxu0
    %v2717 = vadd.f32 %v2676, %v2716
    %v2718 = vpop.f32.mrb[0].mxu0
    %v2719 = vadd.f32 %v2678, %v2718
    %v2720 = vpop.f32.mrb[0].mxu0
    %v2721 = vpop.f32.mrb[0].mxu0
    %2722 = vdwg.mxu0
    %2723 = vmatprep.subr.bf16.mxu0 %v1911
    %2724 = vmatpush1.bf16.msra.mxu0 %v1910
    %2725 = vmatprep.subr.bf16.mxu0 %v1913
    %2726 = vmatpush1.bf16.msra.mxu0 %v1912
    %2727 = vmatprep.subr.bf16.mxu0 %v1915
    %2728 = vmatpush1.bf16.msra.mxu0 %v1914
    %2729 = vmatprep.subr.bf16.mxu0 %v1917
    %2730 = vmatpush1.bf16.msra.mxu0 %v1916
    %2731 = vmatprep.subr.bf16.mxu0 %v1919
    %2732 = vmatpush1.bf16.msra.mxu0 %v1918
    %2733 = vmatprep.subr.bf16.mxu0 %v1921
    %2734 = vmatpush1.bf16.msra.mxu0 %v1920
    %2735 = vmatprep.subr.bf16.mxu0 %v1923
    %2736 = vmatpush1.bf16.msra.mxu0 %v1922
    %2737 = vmatprep.subr.bf16.mxu0 %v1925
    %2738 = vmatpush1.bf16.msra.mxu0 %v1924
    %2739 = vmatprep.subr.bf16.mxu0 %v1927
    %2740 = vmatpush1.bf16.msra.mxu0 %v1926
    %2741 = vmatprep.subr.bf16.mxu0 %v1929
    %2742 = vmatpush1.bf16.msra.mxu0 %v1928
    %2743 = vmatprep.subr.bf16.mxu0 %v1931
    %2744 = vmatpush1.bf16.msra.mxu0 %v1930
    %2745 = vmatprep.subr.bf16.mxu0 %v1933
    %2746 = vmatpush1.bf16.msra.mxu0 %v1932
    %2747 = vmatprep.subr.bf16.mxu0 %v1935
    %2748 = vmatpush1.bf16.msra.mxu0 %v1934
    %2749 = vmatprep.subr.bf16.mxu0 %v1937
    %2750 = vmatpush1.bf16.msra.mxu0 %v1936
    %2751 = vmatprep.subr.bf16.mxu0 %v1939
    %2752 = vmatpush1.bf16.msra.mxu0 %v1938
    %2753 = vmatprep.subr.bf16.mxu0 %v1941
    %2754 = vmatpush1.bf16.msra.mxu0 %v1940
    %2755 = vmatprep.mubr.bf16.mxu0 %v523
    %2756 = vmatmul.mubr.bf16.gmra.mrb[0].mxu0 %v521
    %v2757 = vpop.f32.mrb[0].mxu0
    %v2758 = vadd.f32 %v2717, %v2757
    %v2759 = vpop.f32.mrb[0].mxu0
    %v2760 = vadd.f32 %v2719, %v2759
    %v2761 = vpop.f32.mrb[0].mxu0
    %v2762 = vpop.f32.mrb[0].mxu0
    %2763 = vdwg.mxu0
    %2764 = vmatprep.subr.bf16.mxu0 %v1943
    %2765 = vmatpush1.bf16.msra.mxu0 %v1942
    %2766 = vmatprep.subr.bf16.mxu0 %v1945
    %2767 = vmatpush1.bf16.msra.mxu0 %v1944
    %2768 = vmatprep.subr.bf16.mxu0 %v1947
    %2769 = vmatpush1.bf16.msra.mxu0 %v1946
    %2770 = vmatprep.subr.bf16.mxu0 %v1949
    %2771 = vmatpush1.bf16.msra.mxu0 %v1948
    %2772 = vmatprep.subr.bf16.mxu0 %v1951
    %2773 = vmatpush1.bf16.msra.mxu0 %v1950
    %2774 = vmatprep.subr.bf16.mxu0 %v1953
    %2775 = vmatpush1.bf16.msra.mxu0 %v1952
    %2776 = vmatprep.subr.bf16.mxu0 %v1955
    %2777 = vmatpush1.bf16.msra.mxu0 %v1954
    %2778 = vmatprep.subr.bf16.mxu0 %v1957
    %2779 = vmatpush1.bf16.msra.mxu0 %v1956
    %2780 = vmatprep.subr.bf16.mxu0 %v1959
    %2781 = vmatpush1.bf16.msra.mxu0 %v1958
    %2782 = vmatprep.subr.bf16.mxu0 %v1961
    %2783 = vmatpush1.bf16.msra.mxu0 %v1960
    %2784 = vmatprep.subr.bf16.mxu0 %v1963
    %2785 = vmatpush1.bf16.msra.mxu0 %v1962
    %2786 = vmatprep.subr.bf16.mxu0 %v1965
    %2787 = vmatpush1.bf16.msra.mxu0 %v1964
    %2788 = vmatprep.subr.bf16.mxu0 %v1967
    %2789 = vmatpush1.bf16.msra.mxu0 %v1966
    %2790 = vmatprep.subr.bf16.mxu0 %v1969
    %2791 = vmatpush1.bf16.msra.mxu0 %v1968
    %2792 = vmatprep.subr.bf16.mxu0 %v1971
    %2793 = vmatpush1.bf16.msra.mxu0 %v1970
    %2794 = vmatprep.subr.bf16.mxu0 %v1973
    %2795 = vmatpush1.bf16.msra.mxu0 %v1972
    %2796 = vmatprep.mubr.bf16.mxu0 %v520
    %2797 = vmatmul.mubr.bf16.gmra.mrb[0].mxu0 %v506
    %v2798 = vpop.f32.mrb[0].mxu0
    %v2799 = vadd.f32 %v2758, %v2798
    %v2800 = vpop.f32.mrb[0].mxu0
    %v2801 = vadd.f32 %v2760, %v2800
    %v2802 = vpop.f32.mrb[0].mxu0
    %v2803 = vpop.f32.mrb[0].mxu0
    %2804 = vdwg.mxu0
    %2805 = vmatprep.subr.bf16.mxu0 %v1975
    %2806 = vmatpush1.bf16.msra.mxu0 %v1974
    %2807 = vmatprep.subr.bf16.mxu0 %v1977
    %2808 = vmatpush1.bf16.msra.mxu0 %v1976
    %2809 = vmatprep.subr.bf16.mxu0 %v1979
    %2810 = vmatpush1.bf16.msra.mxu0 %v1978
    %2811 = vmatprep.subr.bf16.mxu0 %v1981
    %2812 = vmatpush1.bf16.msra.mxu0 %v1980
    %2813 = vmatprep.subr.bf16.mxu0 %v1983
    %2814 = vmatpush1.bf16.msra.mxu0 %v1982
    %2815 = vmatprep.subr.bf16.mxu0 %v1985
    %2816 = vmatpush1.bf16.msra.mxu0 %v1984
    %2817 = vmatprep.subr.bf16.mxu0 %v1987
    %2818 = vmatpush1.bf16.msra.mxu0 %v1986
    %2819 = vmatprep.subr.bf16.mxu0 %v1989
    %2820 = vmatpush1.bf16.msra.mxu0 %v1988
    %2821 = vmatprep.subr.bf16.mxu0 %v1991
    %2822 = vmatpush1.bf16.msra.mxu0 %v1990
    %2823 = vmatprep.subr.bf16.mxu0 %v1993
    %2824 = vmatpush1.bf16.msra.mxu0 %v1992
    %2825 = vmatprep.subr.bf16.mxu0 %v1995
    %2826 = vmatpush1.bf16.msra.mxu0 %v1994
    %2827 = vmatprep.subr.bf16.mxu0 %v1997
    %2828 = vmatpush1.bf16.msra.mxu0 %v1996
    %2829 = vmatprep.subr.bf16.mxu0 %v1999
    %2830 = vmatpush1.bf16.msra.mxu0 %v1998
    %2831 = vmatprep.subr.bf16.mxu0 %v2001
    %2832 = vmatpush1.bf16.msra.mxu0 %v2000
    %2833 = vmatprep.subr.bf16.mxu0 %v2003
    %2834 = vmatpush1.bf16.msra.mxu0 %v2002
    %2835 = vmatprep.subr.bf16.mxu0 %v2005
    %2836 = vmatpush1.bf16.msra.mxu0 %v2004
    %2837 = vmatprep.mubr.bf16.mxu0 %v524
    %2838 = vmatmul.mubr.bf16.gmra.mrb[0].mxu0 %v522
    %v2839 = vpop.f32.mrb[0].mxu0
    %v2840 = vadd.f32 %v2799, %v2839
    %v2841 = vpop.f32.mrb[0].mxu0
    %v2842 = vadd.f32 %v2801, %v2841
    %v2843 = vpop.f32.mrb[0].mxu0
    %v2844 = vpop.f32.mrb[0].mxu0
    %2845 = vdwg.mxu0
    %2846 = vmatprep.subr.bf16.mxu0 %v2007
    %2847 = vmatpush1.bf16.msra.mxu0 %v2006
    %2848 = vmatprep.subr.bf16.mxu0 %v2009
    %2849 = vmatpush1.bf16.msra.mxu0 %v2008
    %2850 = vmatprep.subr.bf16.mxu0 %v2011
    %2851 = vmatpush1.bf16.msra.mxu0 %v2010
    %2852 = vmatprep.subr.bf16.mxu0 %v2013
    %2853 = vmatpush1.bf16.msra.mxu0 %v2012
    %2854 = vmatprep.subr.bf16.mxu0 %v2015
    %2855 = vmatpush1.bf16.msra.mxu0 %v2014
    %2856 = vmatprep.subr.bf16.mxu0 %v2017
    %2857 = vmatpush1.bf16.msra.mxu0 %v2016
    %2858 = vmatprep.subr.bf16.mxu0 %v2019
    %2859 = vmatpush1.bf16.msra.mxu0 %v2018
    %2860 = vmatprep.subr.bf16.mxu0 %v2021
    %2861 = vmatpush1.bf16.msra.mxu0 %v2020
    %2862 = vmatprep.subr.bf16.mxu0 %v2023
    %2863 = vmatpush1.bf16.msra.mxu0 %v2022
    %2864 = vmatprep.subr.bf16.mxu0 %v2025
    %2865 = vmatpush1.bf16.msra.mxu0 %v2024
    %2866 = vmatprep.subr.bf16.mxu0 %v2027
    %2867 = vmatpush1.bf16.msra.mxu0 %v2026
    %2868 = vmatprep.subr.bf16.mxu0 %v2029
    %2869 = vmatpush1.bf16.msra.mxu0 %v2028
    %2870 = vmatprep.subr.bf16.mxu0 %v2031
    %2871 = vmatpush1.bf16.msra.mxu0 %v2030
    %2872 = vmatprep.subr.bf16.mxu0 %v2033
    %2873 = vmatpush1.bf16.msra.mxu0 %v2032
    %2874 = vmatprep.subr.bf16.mxu0 %v2035
    %2875 = vmatpush1.bf16.msra.mxu0 %v2034
    %2876 = vmatprep.subr.bf16.mxu0 %v2037
    %2877 = vmatpush1.bf16.msra.mxu0 %v2036
    %2878 = vmatprep.mubr.bf16.mxu0 %v562
    %2879 = vmatmul.mubr.bf16.gmra.mrb[0].mxu0 %v548
    %v2880 = vpop.f32.mrb[0].mxu0
    %v2881 = vadd.f32 %v2840, %v2880
    %v2882 = vpop.f32.mrb[0].mxu0
    %v2883 = vadd.f32 %v2842, %v2882
    %v2884 = vpop.f32.mrb[0].mxu0
    %v2885 = vpop.f32.mrb[0].mxu0
    %2886 = vdwg.mxu0
    %2887 = vmatprep.subr.bf16.mxu0 %v2039
    %2888 = vmatpush1.bf16.msra.mxu0 %v2038
    %2889 = vmatprep.subr.bf16.mxu0 %v2041
    %2890 = vmatpush1.bf16.msra.mxu0 %v2040
    %2891 = vmatprep.subr.bf16.mxu0 %v2043
    %2892 = vmatpush1.bf16.msra.mxu0 %v2042
    %2893 = vmatprep.subr.bf16.mxu0 %v2045
    %2894 = vmatpush1.bf16.msra.mxu0 %v2044
    %2895 = vmatprep.subr.bf16.mxu0 %v2047
    %2896 = vmatpush1.bf16.msra.mxu0 %v2046
    %2897 = vmatprep.subr.bf16.mxu0 %v2049
    %2898 = vmatpush1.bf16.msra.mxu0 %v2048
    %2899 = vmatprep.subr.bf16.mxu0 %v2051
    %2900 = vmatpush1.bf16.msra.mxu0 %v2050
    %2901 = vmatprep.subr.bf16.mxu0 %v2053
    %2902 = vmatpush1.bf16.msra.mxu0 %v2052
    %2903 = vmatprep.subr.bf16.mxu0 %v2055
    %2904 = vmatpush1.bf16.msra.mxu0 %v2054
    %2905 = vmatprep.subr.bf16.mxu0 %v2057
    %2906 = vmatpush1.bf16.msra.mxu0 %v2056
    %2907 = vmatprep.subr.bf16.mxu0 %v2059
    %2908 = vmatpush1.bf16.msra.mxu0 %v2058
    %2909 = vmatprep.subr.bf16.mxu0 %v2061
    %2910 = vmatpush1.bf16.msra.mxu0 %v2060
    %2911 = vmatprep.subr.bf16.mxu0 %v2063
    %2912 = vmatpush1.bf16.msra.mxu0 %v2062
    %2913 = vmatprep.subr.bf16.mxu0 %v2065
    %2914 = vmatpush1.bf16.msra.mxu0 %v2064
    %2915 = vmatprep.subr.bf16.mxu0 %v2067
    %2916 = vmatpush1.bf16.msra.mxu0 %v2066
    %2917 = vmatprep.subr.bf16.mxu0 %v2069
    %2918 = vmatpush1.bf16.msra.mxu0 %v2068
    %2919 = vmatprep.mubr.bf16.mxu0 %v572
    %2920 = vmatmul.mubr.bf16.gmra.mrb[0].mxu0 %v570
    %v2921 = vpop.f32.mrb[0].mxu0
    %v2922 = vadd.f32 %v2881, %v2921
    %v2923 = vpop.f32.mrb[0].mxu0
    %v2924 = vadd.f32 %v2883, %v2923
    %v2925 = vpop.f32.mrb[0].mxu0
    %v2926 = vpop.f32.mrb[0].mxu0
    %2927 = vdwg.mxu0
    %2928 = vmatprep.subr.bf16.mxu0 %v2071
    %2929 = vmatpush1.bf16.msra.mxu0 %v2070
    %2930 = vmatprep.subr.bf16.mxu0 %v2073
    %2931 = vmatpush1.bf16.msra.mxu0 %v2072
    %2932 = vmatprep.subr.bf16.mxu0 %v2075
    %2933 = vmatpush1.bf16.msra.mxu0 %v2074
    %2934 = vmatprep.subr.bf16.mxu0 %v2077
    %2935 = vmatpush1.bf16.msra.mxu0 %v2076
    %2936 = vmatprep.subr.bf16.mxu0 %v2079
    %2937 = vmatpush1.bf16.msra.mxu0 %v2078
    %2938 = vmatprep.subr.bf16.mxu0 %v2081
    %2939 = vmatpush1.bf16.msra.mxu0 %v2080
    %2940 = vmatprep.subr.bf16.mxu0 %v2083
    %2941 = vmatpush1.bf16.msra.mxu0 %v2082
    %2942 = vmatprep.subr.bf16.mxu0 %v2085
    %2943 = vmatpush1.bf16.msra.mxu0 %v2084
    %2944 = vmatprep.subr.bf16.mxu0 %v2087
    %2945 = vmatpush1.bf16.msra.mxu0 %v2086
    %2946 = vmatprep.subr.bf16.mxu0 %v2089
    %2947 = vmatpush1.bf16.msra.mxu0 %v2088
    %2948 = vmatprep.subr.bf16.mxu0 %v2091
    %2949 = vmatpush1.bf16.msra.mxu0 %v2090
    %2950 = vmatprep.subr.bf16.mxu0 %v2093
    %2951 = vmatpush1.bf16.msra.mxu0 %v2092
    %2952 = vmatprep.subr.bf16.mxu0 %v2095
    %2953 = vmatpush1.bf16.msra.mxu0 %v2094
    %2954 = vmatprep.subr.bf16.mxu0 %v2097
    %2955 = vmatpush1.bf16.msra.mxu0 %v2096
    %2956 = vmatprep.subr.bf16.mxu0 %v2099
    %2957 = vmatpush1.bf16.msra.mxu0 %v2098
    %2958 = vmatprep.subr.bf16.mxu0 %v2101
    %2959 = vmatpush1.bf16.msra.mxu0 %v2100
    %2960 = vmatprep.mubr.bf16.mxu0 %v569
    %2961 = vmatmul.mubr.bf16.gmra.mrb[0].mxu0 %v555
    %v2962 = vpop.f32.mrb[0].mxu0
    %v2963 = vadd.f32 %v2922, %v2962
    %v2964 = vpop.f32.mrb[0].mxu0
    %v2965 = vadd.f32 %v2924, %v2964
    %v2966 = vpop.f32.mrb[0].mxu0
    %v2967 = vpop.f32.mrb[0].mxu0
    %2968 = vdwg.mxu0
    %2969 = vmatprep.subr.bf16.mxu0 %v2103
    %2970 = vmatpush1.bf16.msra.mxu0 %v2102
    %2971 = vmatprep.subr.bf16.mxu0 %v2105
    %2972 = vmatpush1.bf16.msra.mxu0 %v2104
    %2973 = vmatprep.subr.bf16.mxu0 %v2107
    %2974 = vmatpush1.bf16.msra.mxu0 %v2106
    %2975 = vmatprep.subr.bf16.mxu0 %v2109
    %2976 = vmatpush1.bf16.msra.mxu0 %v2108
    %2977 = vmatprep.subr.bf16.mxu0 %v2111
    %2978 = vmatpush1.bf16.msra.mxu0 %v2110
    %2979 = vmatprep.subr.bf16.mxu0 %v2113
    %2980 = vmatpush1.bf16.msra.mxu0 %v2112
    %2981 = vmatprep.subr.bf16.mxu0 %v2115
    %2982 = vmatpush1.bf16.msra.mxu0 %v2114
    %2983 = vmatprep.subr.bf16.mxu0 %v2117
    %2984 = vmatpush1.bf16.msra.mxu0 %v2116
    %2985 = vmatprep.subr.bf16.mxu0 %v2119
    %2986 = vmatpush1.bf16.msra.mxu0 %v2118
    %2987 = vmatprep.subr.bf16.mxu0 %v2121
    %2988 = vmatpush1.bf16.msra.mxu0 %v2120
    %2989 = vmatprep.subr.bf16.mxu0 %v2123
    %2990 = vmatpush1.bf16.msra.mxu0 %v2122
    %2991 = vmatprep.subr.bf16.mxu0 %v2125
    %2992 = vmatpush1.bf16.msra.mxu0 %v2124
    %2993 = vmatprep.subr.bf16.mxu0 %v2127
    %2994 = vmatpush1.bf16.msra.mxu0 %v2126
    %2995 = vmatprep.subr.bf16.mxu0 %v2129
    %2996 = vmatpush1.bf16.msra.mxu0 %v2128
    %2997 = vmatprep.subr.bf16.mxu0 %v2131
    %2998 = vmatpush1.bf16.msra.mxu0 %v2130
    %2999 = vmatprep.subr.bf16.mxu0 %v2133
    %3000 = vmatpush1.bf16.msra.mxu0 %v2132
    %3001 = vmatprep.mubr.bf16.mxu0 %v573
    %3002 = vmatmul.mubr.bf16.gmra.mrb[0].mxu0 %v571
    %v3003 = vpop.f32.mrb[0].mxu0
    %v3004 = vadd.f32 %v2963, %v3003
    %v3005 = vpop.f32.mrb[0].mxu0
    %v3006 = vadd.f32 %v2965, %v3005
    %v3007 = vpop.f32.mrb[0].mxu0
    %v3008 = vpop.f32.mrb[0].mxu0
    %3009 = vdwg.mxu0
    %v3010 = vmax.f32 %v3004, 0.0
    %v3011 = vmax.f32 %v3006, 0.0
    %v3012 = vpack.c.bf16 %v3010, %v3010
    %v3013 = vpack.c.bf16 %v3011, %v3011
    %v3014 = vld [vmem:[%s2] sm:$0xf]
    %v3015 = vld [vmem:[%s2 + $0x4] sm:$0xf]
    %v3016 = vld [vmem:[%s2 + $0x8] sm:$0xf]
    %v3017 = vld [vmem:[%s2 + $0xc] sm:$0xf]
    %v3018 = vld [vmem:[%s2 + $0x10] sm:$0xf]
    %v3019 = vld [vmem:[%s2 + $0x14] sm:$0xf]
    %v3020 = vld [vmem:[%s2 + $0x18] sm:$0xf]
    %v3021 = vld [vmem:[%s2 + $0x1c] sm:$0xf]
    %v3022 = vld [vmem:[%s2 + $0x20] sm:$0xf]
    %v3023 = vld [vmem:[%s2 + $0x24] sm:$0xf]
    %v3024 = vld [vmem:[%s2 + $0x28] sm:$0xf]
    %v3025 = vld [vmem:[%s2 + $0x2c] sm:$0xf]
    %v3026 = vld [vmem:[%s2 + $0x30] sm:$0xf]
    %v3027 = vld [vmem:[%s2 + $0x34] sm:$0xf]
    %v3028 = vld [vmem:[%s2 + $0x38] sm:$0xf]
    %v3029 = vld [vmem:[%s2 + $0x3c] sm:$0xf]
    %v3030 = vld [vmem:[%s2 + $0x40] sm:$0xf]
    %v3031 = vld [vmem:[%s2 + $0x44] sm:$0xf]
    %v3032 = vld [vmem:[%s2 + $0x48] sm:$0xf]
    %v3033 = vld [vmem:[%s2 + $0x4c] sm:$0xf]
    %v3034 = vld [vmem:[%s2 + $0x50] sm:$0xf]
    %v3035 = vld [vmem:[%s2 + $0x54] sm:$0xf]
    %v3036 = vld [vmem:[%s2 + $0x58] sm:$0xf]
    %v3037 = vld [vmem:[%s2 + $0x5c] sm:$0xf]
    %v3038 = vld [vmem:[%s2 + $0x60] sm:$0xf]
    %v3039 = vld [vmem:[%s5 + $0x1] sm:$0x1]
    %v3040 = vlaneseq
    %v3041 = vshrl.u32 %v3040, 7
    %v3042 = vsub.s32 0, %v3041
    %v3043 = vrot.slane %v3039, %v3042
    %v3069 = vunpack.c.l.b16 %v3014
    %v3070 = vunpack.c.l.b16 %v3015
    %v3071 = vunpack.c.l.b16 %v3016
    %v3072 = vunpack.c.l.b16 %v3017
    %v3073 = vunpack.c.l.b16 %v3018
    %v3074 = vunpack.c.l.b16 %v3019
    %v3075 = vunpack.c.l.b16 %v3020
    %v3076 = vunpack.c.l.b16 %v3021
    %v3077 = vunpack.c.l.b16 %v3022
    %v3078 = vunpack.c.l.b16 %v3023
    %v3079 = vunpack.c.l.b16 %v3024
    %v3080 = vunpack.c.l.b16 %v3025
    %v3081 = vunpack.c.l.b16 %v3026
    %v3082 = vunpack.c.l.b16 %v3027
    %v3083 = vunpack.c.l.b16 %v3028
    %v3084 = vunpack.c.l.b16 %v3029
    %v3085 = vunpack.c.l.b16 %v3030
    %v3086 = vunpack.c.l.b16 %v3031
    %v3087 = vunpack.c.l.b16 %v3032
    %v3088 = vunpack.c.l.b16 %v3033
    %v3089 = vunpack.c.l.b16 %v3034
    %v3090 = vunpack.c.l.b16 %v3035
    %v3091 = vunpack.c.l.b16 %v3036
    %v3092 = vunpack.c.l.b16 %v3037
    %v3093 = vunpack.c.l.b16 %v3038
    %v3094 = vpack.c.b16 %v3070, %v3069
    %v3095 = vpack.c.b16 %v3072, %v3071
    %v3096 = vpack.c.b16 %v3074, %v3073
    %v3097 = vpack.c.b16 %v3076, %v3075
    %v3098 = vpack.c.b16 %v3078, %v3077
    %v3099 = vpack.c.b16 %v3080, %v3079
    %v3100 = vpack.c.b16 %v3082, %v3081
    %v3101 = vpack.c.b16 %v3084, %v3083
    %v3102 = vpack.c.b16 %v3086, %v3085
    %v3103 = vpack.c.b16 %v3088, %v3087
    %v3104 = vpack.c.b16 %v3090, %v3089
    %v3105 = vpack.c.b16 %v3092, %v3091
    %v3106 = vpack.c.b16 %v3093, %v3093
    %vm3119 = vcmask 588800
    %v3121 = vsel %vm3119, %v3013, 0
    %vm3123 = vcmask 1043456
    %v3125 = vsel %vm3123, %v3106, 0
    %3127 = vmatprep.subr.bf16.mxu0 0
    %3128 = vmatpush1.bf16.msra.mxu0 %v3094
    %3129 = vmatprep.subr.bf16.mxu0 0
    %3130 = vmatpush1.bf16.msra.mxu0 %v3095
    %3131 = vmatprep.subr.bf16.mxu0 0
    %3132 = vmatpush1.bf16.msra.mxu0 %v3096
    %3133 = vmatprep.subr.bf16.mxu0 0
    %3134 = vmatpush1.bf16.msra.mxu0 %v3097
    %3135 = vmatprep.subr.bf16.mxu0 0
    %3136 = vmatpush1.bf16.msra.mxu0 %v3098
    %3137 = vmatprep.subr.bf16.mxu0 0
    %3138 = vmatpush1.bf16.msra.mxu0 %v3099
    %3139 = vmatprep.subr.bf16.mxu0 0
    %3140 = vmatpush1.bf16.msra.mxu0 %v3100
    %3141 = vmatprep.subr.bf16.mxu0 0
    %3142 = vmatpush1.bf16.msra.mxu0 %v3101
    %3143 = vmatprep.subr.bf16.mxu0 0
    %3144 = vmatpush1.bf16.msra.mxu0 %v3102
    %3145 = vmatprep.subr.bf16.mxu0 0
    %3146 = vmatpush1.bf16.msra.mxu0 %v3103
    %3147 = vmatprep.subr.bf16.mxu0 0
    %3148 = vmatpush1.bf16.msra.mxu0 %v3104
    %3149 = vmatprep.subr.bf16.mxu0 0
    %3150 = vmatpush1.bf16.msra.mxu0 %v3105
    %3151 = vmatprep.subr.bf16.mxu0 0
    %3152 = vmatpush1.bf16.msra.mxu0 %v3125
    %3153 = vmatprep.subr.bf16.mxu0 0
    %3154 = vmatpush1.bf16.msra.mxu0 0
    %3155 = vmatprep.subr.bf16.mxu0 0
    %3156 = vmatpush1.bf16.msra.mxu0 0
    %3157 = vmatprep.subr.bf16.mxu0 0
    %3158 = vmatpush1.bf16.msra.mxu0 0
    %3159 = vmatprep.mubr.bf16.mxu0 %v3121
    %3160 = vmatmul.mubr.bf16.gmra.mrb[0].mxu0 %v3012
    %v3161 = vpop.f32.mrb[0].mxu0
    %v3162 = vadd.f32 %v3043, %v3161
    %v3163 = vpop.f32.mrb[0].mxu0
    %v3164 = vpop.f32.mrb[0].mxu0
    %v3165 = vpop.f32.mrb[0].mxu0
    %3166 = vdwg.mxu0
    %v3167 = vmax.f32 %v3162, 0.0
    %v3168 = vpack.c.bf16 %v3167, %v3167
    %v3169 = vld [vmem:[%s3] sm:$0xff]
    %v3170 = vld [vmem:[%s3 + $0x8] sm:$0xff]
    %v3171 = vld [vmem:[%s3 + $0x10] sm:$0xff]
    %v3172 = vld [vmem:[%s3 + $0x18] sm:$0xff]
    %v3173 = vld [vmem:[%s3 + $0x20] sm:$0xff]
    %v3174 = vld [vmem:[%s3 + $0x28] sm:$0xff]
    %v3175 = vld [vmem:[%s3 + $0x30] sm:$0xff]
    %v3176 = vld [vmem:[%s3 + $0x38] sm:$0xff]
    %v3177 = vld [vmem:[%s3 + $0x40] sm:$0xff]
    %v3178 = vld [vmem:[%s3 + $0x48] sm:$0xff]
    %v3179 = vld [vmem:[%s3 + $0x50] sm:$0xff]
    %v3180 = vld [vmem:[%s3 + $0x58] sm:$0xff]
    %v3181 = vld [vmem:[%s3 + $0x60] sm:$0xff]
    %v3182 = vld [vmem:[%s3 + $0x68] sm:$0xff]
    %v3183 = vld [vmem:[%s3 + $0x70] sm:$0xff]
    %v3184 = vld [vmem:[%s3 + $0x78] sm:$0xff]
    %s3185 = scalar_lea.vmem %s5, 2
    %v3186 = vld [vmem:[%s3185] ss:$4 sm:$0x3]
    %v3188 = vlaneseq
    %v3189 = vshrl.u32 %v3188, 7
    %v3190 = vsub.s32 0, %v3189
    %v3191 = vrot.slane %v3186, %v3190
    %v3192 = vlaneseq
    %v3193 = vshrl.u32 %v3192, 7
    %v3194 = vsub.s32 1, %v3193
    %v3195 = vrot.slane %v3186, %v3194
    %v3214 = vunpack.c.l.b16 %v3169
    %v3215 = vunpack.c.h.b16 %v3169
    %v3216 = vunpack.c.l.b16 %v3170
    %v3217 = vunpack.c.h.b16 %v3170
    %v3218 = vunpack.c.l.b16 %v3171
    %v3219 = vunpack.c.h.b16 %v3171
    %v3220 = vunpack.c.l.b16 %v3172
    %v3221 = vunpack.c.h.b16 %v3172
    %v3222 = vunpack.c.l.b16 %v3173
    %v3223 = vunpack.c.h.b16 %v3173
    %v3224 = vunpack.c.l.b16 %v3174
    %v3225 = vunpack.c.h.b16 %v3174
    %v3226 = vunpack.c.l.b16 %v3175
    %v3227 = vunpack.c.h.b16 %v3175
    %v3228 = vunpack.c.l.b16 %v3176
    %v3229 = vunpack.c.h.b16 %v3176
    %v3230 = vunpack.c.l.b16 %v3177
    %v3231 = vunpack.c.h.b16 %v3177
    %v3232 = vunpack.c.l.b16 %v3178
    %v3233 = vunpack.c.h.b16 %v3178
    %v3234 = vunpack.c.l.b16 %v3179
    %v3235 = vunpack.c.h.b16 %v3179
    %v3236 = vunpack.c.l.b16 %v3180
    %v3237 = vunpack.c.h.b16 %v3180
    %v3238 = vunpack.c.l.b16 %v3181
    %v3239 = vunpack.c.h.b16 %v3181
    %v3240 = vunpack.c.l.b16 %v3182
    %v3241 = vunpack.c.h.b16 %v3182
    %v3242 = vunpack.c.l.b16 %v3183
    %v3243 = vunpack.c.h.b16 %v3183
    %v3244 = vunpack.c.l.b16 %v3184
    %v3245 = vunpack.c.h.b16 %v3184
    %v3246 = vpack.c.b16 %v3216, %v3214
    %v3247 = vpack.c.b16 %v3217, %v3215
    %v3248 = vpack.c.b16 %v3220, %v3218
    %v3249 = vpack.c.b16 %v3221, %v3219
    %v3250 = vpack.c.b16 %v3224, %v3222
    %v3251 = vpack.c.b16 %v3225, %v3223
    %v3252 = vpack.c.b16 %v3228, %v3226
    %v3253 = vpack.c.b16 %v3229, %v3227
    %v3254 = vpack.c.b16 %v3232, %v3230
    %v3255 = vpack.c.b16 %v3233, %v3231
    %v3256 = vpack.c.b16 %v3236, %v3234
    %v3257 = vpack.c.b16 %v3237, %v3235
    %v3258 = vpack.c.b16 %v3240, %v3238
    %v3259 = vpack.c.b16 %v3241, %v3239
    %v3260 = vpack.c.b16 %v3244, %v3242
    %v3261 = vpack.c.b16 %v3245, %v3243
    %3278 = vmatprep.subr.bf16.mxu0 %v3247
    %3279 = vmatpush1.bf16.msra.mxu0 %v3246
    %3280 = vmatprep.subr.bf16.mxu0 %v3249
    %3281 = vmatpush1.bf16.msra.mxu0 %v3248
    %3282 = vmatprep.subr.bf16.mxu0 %v3251
    %3283 = vmatpush1.bf16.msra.mxu0 %v3250
    %3284 = vmatprep.subr.bf16.mxu0 %v3253
    %3285 = vmatpush1.bf16.msra.mxu0 %v3252
    %3286 = vmatprep.subr.bf16.mxu0 %v3255
    %3287 = vmatpush1.bf16.msra.mxu0 %v3254
    %3288 = vmatprep.subr.bf16.mxu0 %v3257
    %3289 = vmatpush1.bf16.msra.mxu0 %v3256
    %3290 = vmatprep.subr.bf16.mxu0 %v3259
    %3291 = vmatpush1.bf16.msra.mxu0 %v3258
    %3292 = vmatprep.subr.bf16.mxu0 %v3261
    %3293 = vmatpush1.bf16.msra.mxu0 %v3260
    %3294 = vmatprep.subr.bf16.mxu0 0
    %3295 = vmatpush1.bf16.msra.mxu0 0
    %3296 = vmatprep.subr.bf16.mxu0 0
    %3297 = vmatpush1.bf16.msra.mxu0 0
    %3298 = vmatprep.subr.bf16.mxu0 0
    %3299 = vmatpush1.bf16.msra.mxu0 0
    %3300 = vmatprep.subr.bf16.mxu0 0
    %3301 = vmatpush1.bf16.msra.mxu0 0
    %3302 = vmatprep.subr.bf16.mxu0 0
    %3303 = vmatpush1.bf16.msra.mxu0 0
    %3304 = vmatprep.subr.bf16.mxu0 0
    %3305 = vmatpush1.bf16.msra.mxu0 0
    %3306 = vmatprep.subr.bf16.mxu0 0
    %3307 = vmatpush1.bf16.msra.mxu0 0
    %3308 = vmatprep.subr.bf16.mxu0 0
    %3309 = vmatpush1.bf16.msra.mxu0 0
    %3310 = vmatprep.mubr.bf16.mxu0 0
    %3311 = vmatmul.mubr.bf16.gmra.mrb[0].mxu0 %v3168
    %v3312 = vpop.f32.mrb[0].mxu0
    %v3313 = vadd.f32 %v3191, %v3312
    %v3314 = vpop.f32.mrb[0].mxu0
    %v3315 = vadd.f32 %v3195, %v3314
    %v3316 = vpop.f32.mrb[0].mxu0
    %v3317 = vpop.f32.mrb[0].mxu0
    %3318 = vdwg.mxu0
    %v3319 = vmax.f32 %v3313, 0.0
    %v3320 = vmax.f32 %v3315, 0.0
    %v3321 = vpack.c.bf16 %v3319, %v3319
    %v3322 = vpack.c.bf16 %v3320, %v3320
    %v3323 = vld [vmem:[%s4] sm:$0xf]
    %v3324 = vld [vmem:[%s4 + $0x4] sm:$0xf]
    %v3325 = vld [vmem:[%s4 + $0x8] sm:$0xf]
    %v3326 = vld [vmem:[%s4 + $0xc] sm:$0xf]
    %v3327 = vld [vmem:[%s4 + $0x10] sm:$0xf]
    %v3328 = vld [vmem:[%s4 + $0x14] sm:$0xf]
    %v3329 = vld [vmem:[%s4 + $0x18] sm:$0xf]
    %v3330 = vld [vmem:[%s4 + $0x1c] sm:$0xf]
    %v3331 = vld [vmem:[%s4 + $0x20] sm:$0xf]
    %v3332 = vld [vmem:[%s4 + $0x24] sm:$0xf]
    %v3333 = vld [vmem:[%s4 + $0x28] sm:$0xf]
    %v3334 = vld [vmem:[%s4 + $0x2c] sm:$0xf]
    %v3335 = vld [vmem:[%s4 + $0x30] sm:$0xf]
    %v3336 = vld [vmem:[%s4 + $0x34] sm:$0xf]
    %v3337 = vld [vmem:[%s4 + $0x38] sm:$0xf]
    %v3338 = vld [vmem:[%s4 + $0x3c] sm:$0xf]
    %v3339 = vld [vmem:[%s4 + $0x40] sm:$0xf]
    %v3340 = vld [vmem:[%s4 + $0x44] sm:$0xf]
    %v3341 = vld [vmem:[%s4 + $0x48] sm:$0xf]
    %v3342 = vld [vmem:[%s4 + $0x4c] sm:$0xf]
    %v3343 = vld [vmem:[%s4 + $0x50] sm:$0xf]
    %v3344 = vld [vmem:[%s4 + $0x54] sm:$0xf]
    %v3345 = vld [vmem:[%s4 + $0x58] sm:$0xf]
    %v3346 = vld [vmem:[%s4 + $0x5c] sm:$0xf]
    %v3347 = vld [vmem:[%s4 + $0x60] sm:$0xf]
    %v3348 = vld [vmem:[%s5 + $0x3] sm:$0x1]
    %v3349 = vlaneseq
    %v3350 = vshrl.u32 %v3349, 7
    %v3351 = vsub.s32 0, %v3350
    %v3352 = vrot.slane %v3348, %v3351
    %v3378 = vunpack.c.l.b16 %v3323
    %v3379 = vunpack.c.l.b16 %v3324
    %v3380 = vunpack.c.l.b16 %v3325
    %v3381 = vunpack.c.l.b16 %v3326
    %v3382 = vunpack.c.l.b16 %v3327
    %v3383 = vunpack.c.l.b16 %v3328
    %v3384 = vunpack.c.l.b16 %v3329
    %v3385 = vunpack.c.l.b16 %v3330
    %v3386 = vunpack.c.l.b16 %v3331
    %v3387 = vunpack.c.l.b16 %v3332
    %v3388 = vunpack.c.l.b16 %v3333
    %v3389 = vunpack.c.l.b16 %v3334
    %v3390 = vunpack.c.l.b16 %v3335
    %v3391 = vunpack.c.l.b16 %v3336
    %v3392 = vunpack.c.l.b16 %v3337
    %v3393 = vunpack.c.l.b16 %v3338
    %v3394 = vunpack.c.l.b16 %v3339
    %v3395 = vunpack.c.l.b16 %v3340
    %v3396 = vunpack.c.l.b16 %v3341
    %v3397 = vunpack.c.l.b16 %v3342
    %v3398 = vunpack.c.l.b16 %v3343
    %v3399 = vunpack.c.l.b16 %v3344
    %v3400 = vunpack.c.l.b16 %v3345
    %v3401 = vunpack.c.l.b16 %v3346
    %v3402 = vunpack.c.l.b16 %v3347
    %v3403 = vpack.c.b16 %v3379, %v3378
    %v3404 = vpack.c.b16 %v3381, %v3380
    %v3405 = vpack.c.b16 %v3383, %v3382
    %v3406 = vpack.c.b16 %v3385, %v3384
    %v3407 = vpack.c.b16 %v3387, %v3386
    %v3408 = vpack.c.b16 %v3389, %v3388
    %v3409 = vpack.c.b16 %v3391, %v3390
    %v3410 = vpack.c.b16 %v3393, %v3392
    %v3411 = vpack.c.b16 %v3395, %v3394
    %v3412 = vpack.c.b16 %v3397, %v3396
    %v3413 = vpack.c.b16 %v3399, %v3398
    %v3414 = vpack.c.b16 %v3401, %v3400
    %v3415 = vpack.c.b16 %v3402, %v3402
    %v3429 = vsel %vm3119, %v3322, 0
    %v3432 = vsel %vm3123, %v3415, 0
    %3434 = vmatprep.subr.bf16.mxu0 0
    %3435 = vmatpush1.bf16.msra.mxu0 %v3403
    %3436 = vmatprep.subr.bf16.mxu0 0
    %3437 = vmatpush1.bf16.msra.mxu0 %v3404
    %3438 = vmatprep.subr.bf16.mxu0 0
    %3439 = vmatpush1.bf16.msra.mxu0 %v3405
    %3440 = vmatprep.subr.bf16.mxu0 0
    %3441 = vmatpush1.bf16.msra.mxu0 %v3406
    %3442 = vmatprep.subr.bf16.mxu0 0
    %3443 = vmatpush1.bf16.msra.mxu0 %v3407
    %3444 = vmatprep.subr.bf16.mxu0 0
    %3445 = vmatpush1.bf16.msra.mxu0 %v3408
    %3446 = vmatprep.subr.bf16.mxu0 0
    %3447 = vmatpush1.bf16.msra.mxu0 %v3409
    %3448 = vmatprep.subr.bf16.mxu0 0
    %3449 = vmatpush1.bf16.msra.mxu0 %v3410
    %3450 = vmatprep.subr.bf16.mxu0 0
    %3451 = vmatpush1.bf16.msra.mxu0 %v3411
    %3452 = vmatprep.subr.bf16.mxu0 0
    %3453 = vmatpush1.bf16.msra.mxu0 %v3412
    %3454 = vmatprep.subr.bf16.mxu0 0
    %3455 = vmatpush1.bf16.msra.mxu0 %v3413
    %3456 = vmatprep.subr.bf16.mxu0 0
    %3457 = vmatpush1.bf16.msra.mxu0 %v3414
    %3458 = vmatprep.subr.bf16.mxu0 0
    %3459 = vmatpush1.bf16.msra.mxu0 %v3432
    %3460 = vmatprep.subr.bf16.mxu0 0
    %3461 = vmatpush1.bf16.msra.mxu0 0
    %3462 = vmatprep.subr.bf16.mxu0 0
    %3463 = vmatpush1.bf16.msra.mxu0 0
    %3464 = vmatprep.subr.bf16.mxu0 0
    %3465 = vmatpush1.bf16.msra.mxu0 0
    %3466 = vmatprep.mubr.bf16.mxu0 %v3429
    %3467 = vmatmul.mubr.bf16.gmra.mrb[0].mxu0 %v3321
    %v3468 = vpop.f32.mrb[0].mxu0
    %v3469 = vadd.f32 %v3352, %v3468
    %v3470 = vpop.f32.mrb[0].mxu0
    %v3471 = vpop.f32.mrb[0].mxu0
    %v3472 = vpop.f32.mrb[0].mxu0
    %3473 = vdwg.mxu0
    %vm3474 = vcmask 74752
    %3475 = vst.msk [vmem:[#allocation2] sm:$0x3] %vm3474, %v3469
    // Predicated region
    $region26: #{dnn3_forward.1} parent=1 // pred_check
      _
    $region27: #{dnn3_forward.1} parent=1 // pred_check_branch
      %3477 = sbr.rel (0) target = $region29
    $region28: #{dnn3_forward.1} parent=1 // pred_region
      %s3479 = ssub.s32 32, 32
      %3480 = vsyncadd [#allocation3], %s3479
      %s3482 = sshll.u32 [#allocation2], 4
      %s3483 = int_to_ptr.vmem [resolvable:$true] %s3482
      %3485 = dma.vmem_to_hbm [thread:$0]  %s3483, 32, %s6, [#allocation3]
    $region29: #{dnn3_forward.1} parent=1 // pred_fallthru
      _
    // Predicated region
    $region30: #{dnn3_forward.1} parent=1 // pred_check
      _
    $region31: #{dnn3_forward.1} parent=1 // pred_check_branch
      %3487 = sbr.rel (0) target = $region33
    $region32: #{dnn3_forward.1} parent=1 // pred_region
      %3488 = dma.done [#allocation3], 32
    $region33: #{dnn3_forward.1} parent=1 // pred_fallthru
      _
    %3489 = vsyncpa [#allocation3], 1

</llo_original>
